<compile_context>
chip_gen: v6e
topology: v6e:2x2x1
jax: 0.10.0
libtpu: 0.0.40
codegen_flags: <defaults>
</compile_context>

<pallas_src>
import jax
import jax.numpy as jnp
import numpy as np
from jax import lax
from jax.experimental import pallas as pl
from jax.experimental.pallas import tpu as pltpu


def _build_tap_masks(H, W):
    """(9, H*W) float32 validity masks for the 3x3 taps (zeros padding)."""
    h = np.arange(H)[:, None]
    w = np.arange(W)[None, :]
    masks = []
    for ky in range(3):
        dy = ky - 1
        for kx in range(3):
            dx = kx - 1
            valid = ((h + dy >= 0) & (h + dy < H) &
                     (w + dx >= 0) & (w + dx < W))
            masks.append(valid.reshape(-1))
    return jnp.asarray(np.stack(masks, axis=0).astype(np.float32))


def _make_block_kernel(Nb, C_in, C_out, H, W, G, eps, has_scale_shift):
    HW = H * W
    Cg = C_out // G
    inv_cnt = 1.0 / float(Cg * HW)
    offs = [(ky - 1) * W + (kx - 1) for ky in range(3) for kx in range(3)]

    def kernel(x_ref, w_ref, b_ref, gamma_ref, beta_ref, mask_ref, *rest):
        if has_scale_shift:
            scale_ref, shift_ref, o_ref = rest
        else:
            (o_ref,) = rest

        wm = w_ref[...].astype(jnp.float32)        # (C_out, 9*C_in), tap-major
        bias = b_ref[...].astype(jnp.float32)      # (C_out, 1)
        gamma = gamma_ref[...].astype(jnp.float32) # (C_out, 1)
        beta = beta_ref[...].astype(jnp.float32)   # (C_out, 1)
        masks = mask_ref[...]                      # (9, HW) f32 {0,1}
        cidx = lax.broadcasted_iota(jnp.int32, (C_out, 1), 0)

        for m in range(Nb):                        # images folded into one step
            x = x_ref[m].astype(jnp.float32)       # (C_in, HW), lanes = H*W

            # ---- im2col: 9 rolled + masked taps, stacked tap-major ----
            taps = []
            for t, off in enumerate(offs):
                x_sh = x if off == 0 else jnp.roll(x, shift=-off, axis=1)
                taps.append(x_sh * masks[t:t + 1, :])   # zero-pad via mask
            tap_stack = jnp.concatenate(taps, axis=0)   # (9*C_in, HW)

            # ---- 3x3 conv channel mix: one MXU matmul ----
            y = jnp.dot(wm, tap_stack, preferred_element_type=jnp.float32)
            y = y + bias                                # (C_out, HW)

            # ---- GroupNorm stats: one big lane reduce, tiny column math ----
            psum = jnp.sum(y, axis=1, keepdims=True)    # (C_out, 1)
            psq = jnp.sum(y * y, axis=1, keepdims=True) # (C_out, 1)
            mean_c = jnp.zeros((C_out, 1), jnp.float32)
            rstd_c = jnp.zeros((C_out, 1), jnp.float32)
            for g in range(G):
                lo, hi = g * Cg, (g + 1) * Cg
                mu = jnp.sum(psum[lo:hi, :]) * inv_cnt
                ex2 = jnp.sum(psq[lo:hi, :]) * inv_cnt
                var = ex2 - mu * mu
                r = lax.rsqrt(var + eps)
                sel = jnp.logical_and(cidx >= lo, cidx < hi)
                mean_c = jnp.where(sel, mu, mean_c)
                rstd_c = jnp.where(sel, r, rstd_c)

            # ---- GN affine (+ optional scale/shift) folded into one FMA ----
            a = gamma * rstd_c                          # (C_out, 1)
            b = beta - mean_c * a                       # (C_out, 1)
            if has_scale_shift:
                sp1 = scale_ref[m].astype(jnp.float32) + 1.0
                a = a * sp1
                b = b * sp1 + shift_ref[m].astype(jnp.float32)

            z = y * a + b                               # (C_out, HW)
            z = z * (1.0 / (1.0 + jnp.exp(-z)))         # SiLU (exp on EUP)
            o_ref[m] = z.astype(o_ref.dtype)            # one full lane-dense store

    return kernel


def block_forward(x, conv_w, conv_b, gn_gamma, gn_beta, scale_shift=None,
                  *, groups=8, eps=1e-5, images_per_step=None):
    """Fused Block.forward in a single Pallas TPU kernel. x: (N, C_in, H, W)."""
    N, C_in, H, W = x.shape
    C_out = conv_w.shape[0]
    assert conv_w.shape == (C_out, C_in, 3, 3)
    assert C_out % groups == 0
    HW = H * W

    # Images per grid step: amortize per-step overhead (v5e/v6e) while keeping
    # >= 2 grid steps whenever N >= 2 so both v7x TensorCores are fed.
    per_image_bytes = 4 * HW * (11 * C_in + 3 * C_out)   # x + taps + y + z, f32
    if images_per_step is None:
        nb = max(1, min(N // 2 if N >= 2 else 1,
                        max(1, (24 << 20) // max(per_image_bytes, 1))))
        while N % nb:
            nb -= 1
    else:
        nb = images_per_step
    assert N % nb == 0
    grid = (N // nb,)

    x_flat = x.reshape(N, C_in, HW)                      # free reshape, NCHW native
    w_mat = jnp.transpose(conv_w, (0, 2, 3, 1)).reshape(C_out, 9 * C_in)  # tap-major
    b_col = conv_b.reshape(C_out, 1)
    g_col = gn_gamma.reshape(C_out, 1)
    be_col = gn_beta.reshape(C_out, 1)
    tap_masks = _build_tap_masks(H, W)                   # (9, HW), replicated input

    inputs = [x_flat, w_mat, b_col, g_col, be_col, tap_masks]
    in_specs = [
        pl.BlockSpec((nb, C_in, HW), lambda i: (i, 0, 0)),     # lane-dense images
        pl.BlockSpec((C_out, 9 * C_in), lambda i: (0, 0)),     # conv weight
        pl.BlockSpec((C_out, 1), lambda i: (0, 0)),            # conv bias
        pl.BlockSpec((C_out, 1), lambda i: (0, 0)),            # GN gamma
        pl.BlockSpec((C_out, 1), lambda i: (0, 0)),            # GN beta
        pl.BlockSpec((9, HW), lambda i: (0, 0)),               # tap border masks
    ]

    has_ss = scale_shift is not None
    if has_ss:
        scale, shift = scale_shift
        inputs += [scale.reshape(N, C_out, 1), shift.reshape(N, C_out, 1)]
        in_specs += [pl.BlockSpec((nb, C_out, 1), lambda i: (i, 0, 0)),
                     pl.BlockSpec((nb, C_out, 1), lambda i: (i, 0, 0))]

    kernel = _make_block_kernel(nb, C_in, C_out, H, W, groups, eps, has_ss)

    flops = 2 * N * HW * C_out * C_in * 9 + 12 * N * C_out * HW
    bytes_accessed = 4 * (N * C_in * HW + N * C_out * HW
                          + C_out * C_in * 9 + 3 * C_out + 9 * HW
                          + (2 * N * C_out if has_ss else 0))

    # Only raise the scoped VMEM limit when the per-step footprint needs it.
    vmem_limit = None
    est_vmem = 2 * 4 * nb * HW * (C_in + C_out) + nb * per_image_bytes
    if est_vmem > (24 << 20):
        vmem_limit = int(min(2 * est_vmem, 128 << 20))

    out_flat = pl.pallas_call(
        kernel,
        out_shape=jax.ShapeDtypeStruct((N, C_out, HW), x.dtype),
        grid=grid,
        in_specs=in_specs,
        out_specs=pl.BlockSpec((nb, C_out, HW), lambda i: (i, 0, 0)),
        compiler_params=pltpu.CompilerParams(
            dimension_semantics=("parallel",),
            vmem_limit_bytes=vmem_limit),
        cost_estimate=pl.CostEstimate(flops=flops,
                                      transcendentals=N * C_out * HW,
                                      bytes_accessed=bytes_accessed),
    )(*inputs)
    return out_flat.reshape(N, C_out, H, W)              # free reshape back to NCHW


def block_reference(x, conv_w, conv_b, gn_gamma, gn_beta, scale_shift=None,
                    *, groups=8, eps=1e-5):
    """Pure-JAX reference matching the PyTorch module."""
    y = lax.conv_general_dilated(x, conv_w, window_strides=(1, 1),
                                 padding=((1, 1), (1, 1)),
                                 dimension_numbers=("NCHW", "OIHW", "NCHW"))
    y = y + conv_b.reshape(1, -1, 1, 1)
    N, C, H, W = y.shape
    Cg = C // groups
    yr = y.reshape(N, groups, Cg, H, W)
    mean = yr.mean(axis=(2, 3, 4), keepdims=True)
    var = yr.var(axis=(2, 3, 4), keepdims=True)
    yn = ((yr - mean) / jnp.sqrt(var + eps)).reshape(N, C, H, W)
    yn = yn * gn_gamma.reshape(1, C, 1, 1) + gn_beta.reshape(1, C, 1, 1)
    if scale_shift is not None:
        scale, shift = scale_shift
        yn = yn * (scale + 1.0) + shift
    return yn * jax.nn.sigmoid(yn)


if __name__ == "__main__":
    key = jax.random.PRNGKey(0)
    kx, kw, kb, kg, kbe, ks, ksh = jax.random.split(key, 7)

    N, C_in, C_out, H, W, G = 2, 4, 16, 16, 16, 8
    x = jax.random.normal(kx, (N, C_in, H, W), dtype=jnp.float32)
    conv_w = jax.random.normal(kw, (C_out, C_in, 3, 3), dtype=jnp.float32) * 0.2
    conv_b = jax.random.normal(kb, (C_out,), dtype=jnp.float32) * 0.1
    gn_gamma = 1.0 + 0.1 * jax.random.normal(kg, (C_out,), dtype=jnp.float32)
    gn_beta = 0.1 * jax.random.normal(kbe, (C_out,), dtype=jnp.float32)
    scale = 0.1 * jax.random.normal(ks, (N, C_out, 1, 1), dtype=jnp.float32)
    shift = 0.1 * jax.random.normal(ksh, (N, C_out, 1, 1), dtype=jnp.float32)

    # path 1: forward(x)  (scale_shift=None)
    out = jax.block_until_ready(
        block_forward(x, conv_w, conv_b, gn_gamma, gn_beta, groups=G))
    ref = block_reference(x, conv_w, conv_b, gn_gamma, gn_beta, groups=G)
    assert out.shape == (N, C_out, H, W)
    assert jnp.allclose(out, ref, atol=2e-4, rtol=2e-4), \
        float(jnp.max(jnp.abs(out - ref)))

    # path 2: forward(x, scale_shift=(scale, shift))
    out2 = jax.block_until_ready(
        block_forward(x, conv_w, conv_b, gn_gamma, gn_beta, (scale, shift), groups=G))
    ref2 = block_reference(x, conv_w, conv_b, gn_gamma, gn_beta, (scale, shift), groups=G)
    assert jnp.allclose(out2, ref2, atol=2e-4, rtol=2e-4), \
        float(jnp.max(jnp.abs(out2 - ref2)))

    print("KERNEL_OK")
</pallas_src>

<mosaic_0001>
module attributes {stable_mosaic.version = 11 : i64} {
  func.func @kernel(%arg0: i32, %arg1: memref<1x4x256xf32, #tpu.memory_space<vmem>>, %arg2: memref<16x36xf32, #tpu.memory_space<vmem>>, %arg3: memref<16x1xf32, #tpu.memory_space<vmem>>, %arg4: memref<16x1xf32, #tpu.memory_space<vmem>>, %arg5: memref<16x1xf32, #tpu.memory_space<vmem>>, %arg6: memref<9x256xf32, #tpu.memory_space<vmem>>, %arg7: memref<1x16x256xf32, #tpu.memory_space<vmem>>) attributes {dimension_semantics = [#tpu.dimension_semantics<parallel>], iteration_bounds = array<i64: 2>, scalar_prefetch = 0 : i64, scratch_operands = 0 : i64, tpu.core_type = #tpu.core_type<tc>, window_params = [{transform_indices = @transform_0, window_bounds = array<i64: 1, 4, 256>}, {pipeline_mode = #tpu.pipeline_mode<synchronous>, transform_indices = @transform_1, window_bounds = array<i64: 16, 36>}, {pipeline_mode = #tpu.pipeline_mode<synchronous>, transform_indices = @transform_2, window_bounds = array<i64: 16, 1>}, {pipeline_mode = #tpu.pipeline_mode<synchronous>, transform_indices = @transform_3, window_bounds = array<i64: 16, 1>}, {pipeline_mode = #tpu.pipeline_mode<synchronous>, transform_indices = @transform_4, window_bounds = array<i64: 16, 1>}, {pipeline_mode = #tpu.pipeline_mode<synchronous>, transform_indices = @transform_5, window_bounds = array<i64: 9, 256>}, {transform_indices = @transform_6, window_bounds = array<i64: 1, 16, 256>}]} {
    %c0 = arith.constant 0 : index
    %c0_0 = arith.constant 0 : index
    %0 = vector.load %arg2[%c0, %c0_0] : memref<16x36xf32, #tpu.memory_space<vmem>>, vector<16x36xf32>
    %c0_1 = arith.constant 0 : index
    %c0_2 = arith.constant 0 : index
    %1 = vector.load %arg3[%c0_1, %c0_2] : memref<16x1xf32, #tpu.memory_space<vmem>>, vector<16x1xf32>
    %c0_3 = arith.constant 0 : index
    %c0_4 = arith.constant 0 : index
    %2 = vector.load %arg4[%c0_3, %c0_4] : memref<16x1xf32, #tpu.memory_space<vmem>>, vector<16x1xf32>
    %c0_5 = arith.constant 0 : index
    %c0_6 = arith.constant 0 : index
    %3 = vector.load %arg5[%c0_5, %c0_6] : memref<16x1xf32, #tpu.memory_space<vmem>>, vector<16x1xf32>
    %c0_7 = arith.constant 0 : index
    %c0_8 = arith.constant 0 : index
    %4 = vector.load %arg6[%c0_7, %c0_8] : memref<9x256xf32, #tpu.memory_space<vmem>>, vector<9x256xf32>
    %5 = tpu.iota {dimensions = array<i32: 0>} : vector<16x1xi32>
    %c0_9 = arith.constant 0 : index
    %c0_10 = arith.constant 0 : index
    %c0_11 = arith.constant 0 : index
    %6 = vector.load %arg1[%c0_9, %c0_10, %c0_11] : memref<1x4x256xf32, #tpu.memory_space<vmem>>, vector<1x4x256xf32>
    %7 = vector.shape_cast %6 : vector<1x4x256xf32> to vector<4x256xf32>
    %8 = vector.extract_strided_slice %7 {offsets = [0, 239], sizes = [4, 17], strides = [1, 1]} : vector<4x256xf32> to vector<4x17xf32>
    %9 = vector.extract_strided_slice %7 {offsets = [0, 0], sizes = [4, 239], strides = [1, 1]} : vector<4x256xf32> to vector<4x239xf32>
    %10 = tpu.concatenate %8, %9 in 1 : vector<4x17xf32>, vector<4x239xf32> -> vector<4x256xf32>
    %11 = vector.extract_strided_slice %4 {offsets = [0, 0], sizes = [1, 256], strides = [1, 1]} : vector<9x256xf32> to vector<1x256xf32>
    %12 = vector.broadcast %11 : vector<1x256xf32> to vector<4x256xf32>
    %13 = arith.mulf %10, %12 : vector<4x256xf32>
    %14 = vector.extract_strided_slice %7 {offsets = [0, 240], sizes = [4, 16], strides = [1, 1]} : vector<4x256xf32> to vector<4x16xf32>
    %15 = vector.extract_strided_slice %7 {offsets = [0, 0], sizes = [4, 240], strides = [1, 1]} : vector<4x256xf32> to vector<4x240xf32>
    %16 = tpu.concatenate %14, %15 in 1 : vector<4x16xf32>, vector<4x240xf32> -> vector<4x256xf32>
    %17 = vector.extract_strided_slice %4 {offsets = [1, 0], sizes = [1, 256], strides = [1, 1]} : vector<9x256xf32> to vector<1x256xf32>
    %18 = vector.broadcast %17 : vector<1x256xf32> to vector<4x256xf32>
    %19 = arith.mulf %16, %18 : vector<4x256xf32>
    %20 = vector.extract_strided_slice %7 {offsets = [0, 241], sizes = [4, 15], strides = [1, 1]} : vector<4x256xf32> to vector<4x15xf32>
    %21 = vector.extract_strided_slice %7 {offsets = [0, 0], sizes = [4, 241], strides = [1, 1]} : vector<4x256xf32> to vector<4x241xf32>
    %22 = tpu.concatenate %20, %21 in 1 : vector<4x15xf32>, vector<4x241xf32> -> vector<4x256xf32>
    %23 = vector.extract_strided_slice %4 {offsets = [2, 0], sizes = [1, 256], strides = [1, 1]} : vector<9x256xf32> to vector<1x256xf32>
    %24 = vector.broadcast %23 : vector<1x256xf32> to vector<4x256xf32>
    %25 = arith.mulf %22, %24 : vector<4x256xf32>
    %26 = vector.extract_strided_slice %7 {offsets = [0, 255], sizes = [4, 1], strides = [1, 1]} : vector<4x256xf32> to vector<4x1xf32>
    %27 = vector.extract_strided_slice %7 {offsets = [0, 0], sizes = [4, 255], strides = [1, 1]} : vector<4x256xf32> to vector<4x255xf32>
    %28 = tpu.concatenate %26, %27 in 1 : vector<4x1xf32>, vector<4x255xf32> -> vector<4x256xf32>
    %29 = vector.extract_strided_slice %4 {offsets = [3, 0], sizes = [1, 256], strides = [1, 1]} : vector<9x256xf32> to vector<1x256xf32>
    %30 = vector.broadcast %29 : vector<1x256xf32> to vector<4x256xf32>
    %31 = arith.mulf %28, %30 : vector<4x256xf32>
    %32 = vector.extract_strided_slice %4 {offsets = [4, 0], sizes = [1, 256], strides = [1, 1]} : vector<9x256xf32> to vector<1x256xf32>
    %33 = vector.broadcast %32 : vector<1x256xf32> to vector<4x256xf32>
    %34 = arith.mulf %7, %33 : vector<4x256xf32>
    %35 = vector.extract_strided_slice %7 {offsets = [0, 1], sizes = [4, 255], strides = [1, 1]} : vector<4x256xf32> to vector<4x255xf32>
    %36 = vector.extract_strided_slice %7 {offsets = [0, 0], sizes = [4, 1], strides = [1, 1]} : vector<4x256xf32> to vector<4x1xf32>
    %37 = tpu.concatenate %35, %36 in 1 : vector<4x255xf32>, vector<4x1xf32> -> vector<4x256xf32>
    %38 = vector.extract_strided_slice %4 {offsets = [5, 0], sizes = [1, 256], strides = [1, 1]} : vector<9x256xf32> to vector<1x256xf32>
    %39 = vector.broadcast %38 : vector<1x256xf32> to vector<4x256xf32>
    %40 = arith.mulf %37, %39 : vector<4x256xf32>
    %41 = vector.extract_strided_slice %7 {offsets = [0, 15], sizes = [4, 241], strides = [1, 1]} : vector<4x256xf32> to vector<4x241xf32>
    %42 = vector.extract_strided_slice %7 {offsets = [0, 0], sizes = [4, 15], strides = [1, 1]} : vector<4x256xf32> to vector<4x15xf32>
    %43 = tpu.concatenate %41, %42 in 1 : vector<4x241xf32>, vector<4x15xf32> -> vector<4x256xf32>
    %44 = vector.extract_strided_slice %4 {offsets = [6, 0], sizes = [1, 256], strides = [1, 1]} : vector<9x256xf32> to vector<1x256xf32>
    %45 = vector.broadcast %44 : vector<1x256xf32> to vector<4x256xf32>
    %46 = arith.mulf %43, %45 : vector<4x256xf32>
    %47 = vector.extract_strided_slice %7 {offsets = [0, 16], sizes = [4, 240], strides = [1, 1]} : vector<4x256xf32> to vector<4x240xf32>
    %48 = vector.extract_strided_slice %7 {offsets = [0, 0], sizes = [4, 16], strides = [1, 1]} : vector<4x256xf32> to vector<4x16xf32>
    %49 = tpu.concatenate %47, %48 in 1 : vector<4x240xf32>, vector<4x16xf32> -> vector<4x256xf32>
    %50 = vector.extract_strided_slice %4 {offsets = [7, 0], sizes = [1, 256], strides = [1, 1]} : vector<9x256xf32> to vector<1x256xf32>
    %51 = vector.broadcast %50 : vector<1x256xf32> to vector<4x256xf32>
    %52 = arith.mulf %49, %51 : vector<4x256xf32>
    %53 = vector.extract_strided_slice %7 {offsets = [0, 17], sizes = [4, 239], strides = [1, 1]} : vector<4x256xf32> to vector<4x239xf32>
    %54 = vector.extract_strided_slice %7 {offsets = [0, 0], sizes = [4, 17], strides = [1, 1]} : vector<4x256xf32> to vector<4x17xf32>
    %55 = tpu.concatenate %53, %54 in 1 : vector<4x239xf32>, vector<4x17xf32> -> vector<4x256xf32>
    %56 = vector.extract_strided_slice %4 {offsets = [8, 0], sizes = [1, 256], strides = [1, 1]} : vector<9x256xf32> to vector<1x256xf32>
    %57 = vector.broadcast %56 : vector<1x256xf32> to vector<4x256xf32>
    %58 = arith.mulf %55, %57 : vector<4x256xf32>
    %59 = tpu.concatenate %13, %19, %25, %31, %34, %40, %46, %52, %58 in 0 : vector<4x256xf32>, vector<4x256xf32>, vector<4x256xf32>, vector<4x256xf32>, vector<4x256xf32>, vector<4x256xf32>, vector<4x256xf32>, vector<4x256xf32>, vector<4x256xf32> -> vector<36x256xf32>
    %cst = arith.constant dense<0.000000e+00> : vector<16x256xf32>
    %60 = tpu.matmul %0, %59, %cst {dimension_numbers = #tpu.dot_dimension_numbers<[1], [0], [0], [1], [0, 0, 1, 1], [], []>} : vector<16x36xf32>, vector<36x256xf32>, vector<16x256xf32> -> vector<16x256xf32>
    %61 = vector.broadcast %1 : vector<16x1xf32> to vector<16x256xf32>
    %62 = arith.addf %60, %61 : vector<16x256xf32>
    %cst_12 = arith.constant dense<0.000000e+00> : vector<16xf32>
    %63 = vector.multi_reduction <add>, %62, %cst_12 [1] : vector<16x256xf32> to vector<16xf32>
    %64 = vector.shape_cast %63 : vector<16xf32> to vector<16x1xf32>
    %65 = arith.mulf %62, %62 : vector<16x256xf32>
    %cst_13 = arith.constant dense<0.000000e+00> : vector<16xf32>
    %66 = vector.multi_reduction <add>, %65, %cst_13 [1] : vector<16x256xf32> to vector<16xf32>
    %67 = vector.shape_cast %66 : vector<16xf32> to vector<16x1xf32>
    %cst_14 = arith.constant 0.000000e+00 : f32
    %68 = vector.broadcast %cst_14 : f32 to vector<16x1xf32>
    %cst_15 = arith.constant 0.000000e+00 : f32
    %69 = vector.broadcast %cst_15 : f32 to vector<16x1xf32>
    %70 = vector.extract_strided_slice %64 {offsets = [0, 0], sizes = [2, 1], strides = [1, 1]} : vector<16x1xf32> to vector<2x1xf32>
    %71 = vector.shape_cast %70 : vector<2x1xf32> to vector<1x2x1xf32>
    %cst_16 = arith.constant dense<0.000000e+00> : vector<1xf32>
    %72 = vector.multi_reduction <add>, %71, %cst_16 [1, 2] : vector<1x2x1xf32> to vector<1xf32>
    %73 = vector.shape_cast %72 : vector<1xf32> to vector<1x1x1xf32>
    %74 = vector.extract %73[0, 0, 0] : f32 from vector<1x1x1xf32>
    %cst_17 = arith.constant 0.001953125 : f32
    %75 = arith.mulf %74, %cst_17 : f32
    %76 = vector.extract_strided_slice %67 {offsets = [0, 0], sizes = [2, 1], strides = [1, 1]} : vector<16x1xf32> to vector<2x1xf32>
    %77 = vector.shape_cast %76 : vector<2x1xf32> to vector<1x2x1xf32>
    %cst_18 = arith.constant dense<0.000000e+00> : vector<1xf32>
    %78 = vector.multi_reduction <add>, %77, %cst_18 [1, 2] : vector<1x2x1xf32> to vector<1xf32>
    %79 = vector.shape_cast %78 : vector<1xf32> to vector<1x1x1xf32>
    %80 = vector.extract %79[0, 0, 0] : f32 from vector<1x1x1xf32>
    %cst_19 = arith.constant 0.001953125 : f32
    %81 = arith.mulf %80, %cst_19 : f32
    %82 = arith.mulf %75, %75 : f32
    %83 = arith.subf %81, %82 : f32
    %cst_20 = arith.constant 9.99999974E-6 : f32
    %84 = arith.addf %83, %cst_20 : f32
    %85 = math.rsqrt %84 : f32
    %c0_i32 = arith.constant 0 : i32
    %86 = vector.broadcast %c0_i32 : i32 to vector<16x1xi32>
    %87 = arith.cmpi sge, %5, %86 : vector<16x1xi32>
    %c2_i32 = arith.constant 2 : i32
    %88 = vector.broadcast %c2_i32 : i32 to vector<16x1xi32>
    %89 = arith.cmpi slt, %5, %88 : vector<16x1xi32>
    %90 = arith.andi %87, %89 : vector<16x1xi1>
    %91 = vector.broadcast %75 : f32 to vector<16x1xf32>
    %92 = arith.select %90, %91, %68 : vector<16x1xi1>, vector<16x1xf32>
    %93 = vector.broadcast %85 : f32 to vector<16x1xf32>
    %94 = arith.select %90, %93, %69 : vector<16x1xi1>, vector<16x1xf32>
    %95 = vector.extract_strided_slice %64 {offsets = [2, 0], sizes = [2, 1], strides = [1, 1]} : vector<16x1xf32> to vector<2x1xf32>
    %96 = vector.shape_cast %95 : vector<2x1xf32> to vector<1x2x1xf32>
    %cst_21 = arith.constant dense<0.000000e+00> : vector<1xf32>
    %97 = vector.multi_reduction <add>, %96, %cst_21 [1, 2] : vector<1x2x1xf32> to vector<1xf32>
    %98 = vector.shape_cast %97 : vector<1xf32> to vector<1x1x1xf32>
    %99 = vector.extract %98[0, 0, 0] : f32 from vector<1x1x1xf32>
    %cst_22 = arith.constant 0.001953125 : f32
    %100 = arith.mulf %99, %cst_22 : f32
    %101 = vector.extract_strided_slice %67 {offsets = [2, 0], sizes = [2, 1], strides = [1, 1]} : vector<16x1xf32> to vector<2x1xf32>
    %102 = vector.shape_cast %101 : vector<2x1xf32> to vector<1x2x1xf32>
    %cst_23 = arith.constant dense<0.000000e+00> : vector<1xf32>
    %103 = vector.multi_reduction <add>, %102, %cst_23 [1, 2] : vector<1x2x1xf32> to vector<1xf32>
    %104 = vector.shape_cast %103 : vector<1xf32> to vector<1x1x1xf32>
    %105 = vector.extract %104[0, 0, 0] : f32 from vector<1x1x1xf32>
    %cst_24 = arith.constant 0.001953125 : f32
    %106 = arith.mulf %105, %cst_24 : f32
    %107 = arith.mulf %100, %100 : f32
    %108 = arith.subf %106, %107 : f32
    %cst_25 = arith.constant 9.99999974E-6 : f32
    %109 = arith.addf %108, %cst_25 : f32
    %110 = math.rsqrt %109 : f32
    %c2_i32_26 = arith.constant 2 : i32
    %111 = vector.broadcast %c2_i32_26 : i32 to vector<16x1xi32>
    %112 = arith.cmpi sge, %5, %111 : vector<16x1xi32>
    %c4_i32 = arith.constant 4 : i32
    %113 = vector.broadcast %c4_i32 : i32 to vector<16x1xi32>
    %114 = arith.cmpi slt, %5, %113 : vector<16x1xi32>
    %115 = arith.andi %112, %114 : vector<16x1xi1>
    %116 = vector.broadcast %100 : f32 to vector<16x1xf32>
    %117 = arith.select %115, %116, %92 : vector<16x1xi1>, vector<16x1xf32>
    %118 = vector.broadcast %110 : f32 to vector<16x1xf32>
    %119 = arith.select %115, %118, %94 : vector<16x1xi1>, vector<16x1xf32>
    %120 = vector.extract_strided_slice %64 {offsets = [4, 0], sizes = [2, 1], strides = [1, 1]} : vector<16x1xf32> to vector<2x1xf32>
    %121 = vector.shape_cast %120 : vector<2x1xf32> to vector<1x2x1xf32>
    %cst_27 = arith.constant dense<0.000000e+00> : vector<1xf32>
    %122 = vector.multi_reduction <add>, %121, %cst_27 [1, 2] : vector<1x2x1xf32> to vector<1xf32>
    %123 = vector.shape_cast %122 : vector<1xf32> to vector<1x1x1xf32>
    %124 = vector.extract %123[0, 0, 0] : f32 from vector<1x1x1xf32>
    %cst_28 = arith.constant 0.001953125 : f32
    %125 = arith.mulf %124, %cst_28 : f32
    %126 = vector.extract_strided_slice %67 {offsets = [4, 0], sizes = [2, 1], strides = [1, 1]} : vector<16x1xf32> to vector<2x1xf32>
    %127 = vector.shape_cast %126 : vector<2x1xf32> to vector<1x2x1xf32>
    %cst_29 = arith.constant dense<0.000000e+00> : vector<1xf32>
    %128 = vector.multi_reduction <add>, %127, %cst_29 [1, 2] : vector<1x2x1xf32> to vector<1xf32>
    %129 = vector.shape_cast %128 : vector<1xf32> to vector<1x1x1xf32>
    %130 = vector.extract %129[0, 0, 0] : f32 from vector<1x1x1xf32>
    %cst_30 = arith.constant 0.001953125 : f32
    %131 = arith.mulf %130, %cst_30 : f32
    %132 = arith.mulf %125, %125 : f32
    %133 = arith.subf %131, %132 : f32
    %cst_31 = arith.constant 9.99999974E-6 : f32
    %134 = arith.addf %133, %cst_31 : f32
    %135 = math.rsqrt %134 : f32
    %c4_i32_32 = arith.constant 4 : i32
    %136 = vector.broadcast %c4_i32_32 : i32 to vector<16x1xi32>
    %137 = arith.cmpi sge, %5, %136 : vector<16x1xi32>
    %c6_i32 = arith.constant 6 : i32
    %138 = vector.broadcast %c6_i32 : i32 to vector<16x1xi32>
    %139 = arith.cmpi slt, %5, %138 : vector<16x1xi32>
    %140 = arith.andi %137, %139 : vector<16x1xi1>
    %141 = vector.broadcast %125 : f32 to vector<16x1xf32>
    %142 = arith.select %140, %141, %117 : vector<16x1xi1>, vector<16x1xf32>
    %143 = vector.broadcast %135 : f32 to vector<16x1xf32>
    %144 = arith.select %140, %143, %119 : vector<16x1xi1>, vector<16x1xf32>
    %145 = vector.extract_strided_slice %64 {offsets = [6, 0], sizes = [2, 1], strides = [1, 1]} : vector<16x1xf32> to vector<2x1xf32>
    %146 = vector.shape_cast %145 : vector<2x1xf32> to vector<1x2x1xf32>
    %cst_33 = arith.constant dense<0.000000e+00> : vector<1xf32>
    %147 = vector.multi_reduction <add>, %146, %cst_33 [1, 2] : vector<1x2x1xf32> to vector<1xf32>
    %148 = vector.shape_cast %147 : vector<1xf32> to vector<1x1x1xf32>
    %149 = vector.extract %148[0, 0, 0] : f32 from vector<1x1x1xf32>
    %cst_34 = arith.constant 0.001953125 : f32
    %150 = arith.mulf %149, %cst_34 : f32
    %151 = vector.extract_strided_slice %67 {offsets = [6, 0], sizes = [2, 1], strides = [1, 1]} : vector<16x1xf32> to vector<2x1xf32>
    %152 = vector.shape_cast %151 : vector<2x1xf32> to vector<1x2x1xf32>
    %cst_35 = arith.constant dense<0.000000e+00> : vector<1xf32>
    %153 = vector.multi_reduction <add>, %152, %cst_35 [1, 2] : vector<1x2x1xf32> to vector<1xf32>
    %154 = vector.shape_cast %153 : vector<1xf32> to vector<1x1x1xf32>
    %155 = vector.extract %154[0, 0, 0] : f32 from vector<1x1x1xf32>
    %cst_36 = arith.constant 0.001953125 : f32
    %156 = arith.mulf %155, %cst_36 : f32
    %157 = arith.mulf %150, %150 : f32
    %158 = arith.subf %156, %157 : f32
    %cst_37 = arith.constant 9.99999974E-6 : f32
    %159 = arith.addf %158, %cst_37 : f32
    %160 = math.rsqrt %159 : f32
    %c6_i32_38 = arith.constant 6 : i32
    %161 = vector.broadcast %c6_i32_38 : i32 to vector<16x1xi32>
    %162 = arith.cmpi sge, %5, %161 : vector<16x1xi32>
    %c8_i32 = arith.constant 8 : i32
    %163 = vector.broadcast %c8_i32 : i32 to vector<16x1xi32>
    %164 = arith.cmpi slt, %5, %163 : vector<16x1xi32>
    %165 = arith.andi %162, %164 : vector<16x1xi1>
    %166 = vector.broadcast %150 : f32 to vector<16x1xf32>
    %167 = arith.select %165, %166, %142 : vector<16x1xi1>, vector<16x1xf32>
    %168 = vector.broadcast %160 : f32 to vector<16x1xf32>
    %169 = arith.select %165, %168, %144 : vector<16x1xi1>, vector<16x1xf32>
    %170 = vector.extract_strided_slice %64 {offsets = [8, 0], sizes = [2, 1], strides = [1, 1]} : vector<16x1xf32> to vector<2x1xf32>
    %171 = vector.shape_cast %170 : vector<2x1xf32> to vector<1x2x1xf32>
    %cst_39 = arith.constant dense<0.000000e+00> : vector<1xf32>
    %172 = vector.multi_reduction <add>, %171, %cst_39 [1, 2] : vector<1x2x1xf32> to vector<1xf32>
    %173 = vector.shape_cast %172 : vector<1xf32> to vector<1x1x1xf32>
    %174 = vector.extract %173[0, 0, 0] : f32 from vector<1x1x1xf32>
    %cst_40 = arith.constant 0.001953125 : f32
    %175 = arith.mulf %174, %cst_40 : f32
    %176 = vector.extract_strided_slice %67 {offsets = [8, 0], sizes = [2, 1], strides = [1, 1]} : vector<16x1xf32> to vector<2x1xf32>
    %177 = vector.shape_cast %176 : vector<2x1xf32> to vector<1x2x1xf32>
    %cst_41 = arith.constant dense<0.000000e+00> : vector<1xf32>
    %178 = vector.multi_reduction <add>, %177, %cst_41 [1, 2] : vector<1x2x1xf32> to vector<1xf32>
    %179 = vector.shape_cast %178 : vector<1xf32> to vector<1x1x1xf32>
    %180 = vector.extract %179[0, 0, 0] : f32 from vector<1x1x1xf32>
    %cst_42 = arith.constant 0.001953125 : f32
    %181 = arith.mulf %180, %cst_42 : f32
    %182 = arith.mulf %175, %175 : f32
    %183 = arith.subf %181, %182 : f32
    %cst_43 = arith.constant 9.99999974E-6 : f32
    %184 = arith.addf %183, %cst_43 : f32
    %185 = math.rsqrt %184 : f32
    %c8_i32_44 = arith.constant 8 : i32
    %186 = vector.broadcast %c8_i32_44 : i32 to vector<16x1xi32>
    %187 = arith.cmpi sge, %5, %186 : vector<16x1xi32>
    %c10_i32 = arith.constant 10 : i32
    %188 = vector.broadcast %c10_i32 : i32 to vector<16x1xi32>
    %189 = arith.cmpi slt, %5, %188 : vector<16x1xi32>
    %190 = arith.andi %187, %189 : vector<16x1xi1>
    %191 = vector.broadcast %175 : f32 to vector<16x1xf32>
    %192 = arith.select %190, %191, %167 : vector<16x1xi1>, vector<16x1xf32>
    %193 = vector.broadcast %185 : f32 to vector<16x1xf32>
    %194 = arith.select %190, %193, %169 : vector<16x1xi1>, vector<16x1xf32>
    %195 = vector.extract_strided_slice %64 {offsets = [10, 0], sizes = [2, 1], strides = [1, 1]} : vector<16x1xf32> to vector<2x1xf32>
    %196 = vector.shape_cast %195 : vector<2x1xf32> to vector<1x2x1xf32>
    %cst_45 = arith.constant dense<0.000000e+00> : vector<1xf32>
    %197 = vector.multi_reduction <add>, %196, %cst_45 [1, 2] : vector<1x2x1xf32> to vector<1xf32>
    %198 = vector.shape_cast %197 : vector<1xf32> to vector<1x1x1xf32>
    %199 = vector.extract %198[0, 0, 0] : f32 from vector<1x1x1xf32>
    %cst_46 = arith.constant 0.001953125 : f32
    %200 = arith.mulf %199, %cst_46 : f32
    %201 = vector.extract_strided_slice %67 {offsets = [10, 0], sizes = [2, 1], strides = [1, 1]} : vector<16x1xf32> to vector<2x1xf32>
    %202 = vector.shape_cast %201 : vector<2x1xf32> to vector<1x2x1xf32>
    %cst_47 = arith.constant dense<0.000000e+00> : vector<1xf32>
    %203 = vector.multi_reduction <add>, %202, %cst_47 [1, 2] : vector<1x2x1xf32> to vector<1xf32>
    %204 = vector.shape_cast %203 : vector<1xf32> to vector<1x1x1xf32>
    %205 = vector.extract %204[0, 0, 0] : f32 from vector<1x1x1xf32>
    %cst_48 = arith.constant 0.001953125 : f32
    %206 = arith.mulf %205, %cst_48 : f32
    %207 = arith.mulf %200, %200 : f32
    %208 = arith.subf %206, %207 : f32
    %cst_49 = arith.constant 9.99999974E-6 : f32
    %209 = arith.addf %208, %cst_49 : f32
    %210 = math.rsqrt %209 : f32
    %c10_i32_50 = arith.constant 10 : i32
    %211 = vector.broadcast %c10_i32_50 : i32 to vector<16x1xi32>
    %212 = arith.cmpi sge, %5, %211 : vector<16x1xi32>
    %c12_i32 = arith.constant 12 : i32
    %213 = vector.broadcast %c12_i32 : i32 to vector<16x1xi32>
    %214 = arith.cmpi slt, %5, %213 : vector<16x1xi32>
    %215 = arith.andi %212, %214 : vector<16x1xi1>
    %216 = vector.broadcast %200 : f32 to vector<16x1xf32>
    %217 = arith.select %215, %216, %192 : vector<16x1xi1>, vector<16x1xf32>
    %218 = vector.broadcast %210 : f32 to vector<16x1xf32>
    %219 = arith.select %215, %218, %194 : vector<16x1xi1>, vector<16x1xf32>
    %220 = vector.extract_strided_slice %64 {offsets = [12, 0], sizes = [2, 1], strides = [1, 1]} : vector<16x1xf32> to vector<2x1xf32>
    %221 = vector.shape_cast %220 : vector<2x1xf32> to vector<1x2x1xf32>
    %cst_51 = arith.constant dense<0.000000e+00> : vector<1xf32>
    %222 = vector.multi_reduction <add>, %221, %cst_51 [1, 2] : vector<1x2x1xf32> to vector<1xf32>
    %223 = vector.shape_cast %222 : vector<1xf32> to vector<1x1x1xf32>
    %224 = vector.extract %223[0, 0, 0] : f32 from vector<1x1x1xf32>
    %cst_52 = arith.constant 0.001953125 : f32
    %225 = arith.mulf %224, %cst_52 : f32
    %226 = vector.extract_strided_slice %67 {offsets = [12, 0], sizes = [2, 1], strides = [1, 1]} : vector<16x1xf32> to vector<2x1xf32>
    %227 = vector.shape_cast %226 : vector<2x1xf32> to vector<1x2x1xf32>
    %cst_53 = arith.constant dense<0.000000e+00> : vector<1xf32>
    %228 = vector.multi_reduction <add>, %227, %cst_53 [1, 2] : vector<1x2x1xf32> to vector<1xf32>
    %229 = vector.shape_cast %228 : vector<1xf32> to vector<1x1x1xf32>
    %230 = vector.extract %229[0, 0, 0] : f32 from vector<1x1x1xf32>
    %cst_54 = arith.constant 0.001953125 : f32
    %231 = arith.mulf %230, %cst_54 : f32
    %232 = arith.mulf %225, %225 : f32
    %233 = arith.subf %231, %232 : f32
    %cst_55 = arith.constant 9.99999974E-6 : f32
    %234 = arith.addf %233, %cst_55 : f32
    %235 = math.rsqrt %234 : f32
    %c12_i32_56 = arith.constant 12 : i32
    %236 = vector.broadcast %c12_i32_56 : i32 to vector<16x1xi32>
    %237 = arith.cmpi sge, %5, %236 : vector<16x1xi32>
    %c14_i32 = arith.constant 14 : i32
    %238 = vector.broadcast %c14_i32 : i32 to vector<16x1xi32>
    %239 = arith.cmpi slt, %5, %238 : vector<16x1xi32>
    %240 = arith.andi %237, %239 : vector<16x1xi1>
    %241 = vector.broadcast %225 : f32 to vector<16x1xf32>
    %242 = arith.select %240, %241, %217 : vector<16x1xi1>, vector<16x1xf32>
    %243 = vector.broadcast %235 : f32 to vector<16x1xf32>
    %244 = arith.select %240, %243, %219 : vector<16x1xi1>, vector<16x1xf32>
    %245 = vector.extract_strided_slice %64 {offsets = [14, 0], sizes = [2, 1], strides = [1, 1]} : vector<16x1xf32> to vector<2x1xf32>
    %246 = vector.shape_cast %245 : vector<2x1xf32> to vector<1x2x1xf32>
    %cst_57 = arith.constant dense<0.000000e+00> : vector<1xf32>
    %247 = vector.multi_reduction <add>, %246, %cst_57 [1, 2] : vector<1x2x1xf32> to vector<1xf32>
    %248 = vector.shape_cast %247 : vector<1xf32> to vector<1x1x1xf32>
    %249 = vector.extract %248[0, 0, 0] : f32 from vector<1x1x1xf32>
    %cst_58 = arith.constant 0.001953125 : f32
    %250 = arith.mulf %249, %cst_58 : f32
    %251 = vector.extract_strided_slice %67 {offsets = [14, 0], sizes = [2, 1], strides = [1, 1]} : vector<16x1xf32> to vector<2x1xf32>
    %252 = vector.shape_cast %251 : vector<2x1xf32> to vector<1x2x1xf32>
    %cst_59 = arith.constant dense<0.000000e+00> : vector<1xf32>
    %253 = vector.multi_reduction <add>, %252, %cst_59 [1, 2] : vector<1x2x1xf32> to vector<1xf32>
    %254 = vector.shape_cast %253 : vector<1xf32> to vector<1x1x1xf32>
    %255 = vector.extract %254[0, 0, 0] : f32 from vector<1x1x1xf32>
    %cst_60 = arith.constant 0.001953125 : f32
    %256 = arith.mulf %255, %cst_60 : f32
    %257 = arith.mulf %250, %250 : f32
    %258 = arith.subf %256, %257 : f32
    %cst_61 = arith.constant 9.99999974E-6 : f32
    %259 = arith.addf %258, %cst_61 : f32
    %260 = math.rsqrt %259 : f32
    %c14_i32_62 = arith.constant 14 : i32
    %261 = vector.broadcast %c14_i32_62 : i32 to vector<16x1xi32>
    %262 = arith.cmpi sge, %5, %261 : vector<16x1xi32>
    %c16_i32 = arith.constant 16 : i32
    %263 = vector.broadcast %c16_i32 : i32 to vector<16x1xi32>
    %264 = arith.cmpi slt, %5, %263 : vector<16x1xi32>
    %265 = arith.andi %262, %264 : vector<16x1xi1>
    %266 = vector.broadcast %250 : f32 to vector<16x1xf32>
    %267 = arith.select %265, %266, %242 : vector<16x1xi1>, vector<16x1xf32>
    %268 = vector.broadcast %260 : f32 to vector<16x1xf32>
    %269 = arith.select %265, %268, %244 : vector<16x1xi1>, vector<16x1xf32>
    %270 = arith.mulf %2, %269 : vector<16x1xf32>
    %271 = arith.mulf %267, %270 : vector<16x1xf32>
    %272 = arith.subf %3, %271 : vector<16x1xf32>
    %273 = vector.broadcast %270 : vector<16x1xf32> to vector<16x256xf32>
    %274 = arith.mulf %62, %273 : vector<16x256xf32>
    %275 = vector.broadcast %272 : vector<16x1xf32> to vector<16x256xf32>
    %276 = arith.addf %274, %275 : vector<16x256xf32>
    %cst_63 = arith.constant 0.000000e+00 : f32
    %277 = vector.broadcast %cst_63 : f32 to vector<16x256xf32>
    %278 = arith.subf %277, %276 : vector<16x256xf32>
    %279 = math.exp %278 : vector<16x256xf32>
    %cst_64 = arith.constant 1.000000e+00 : f32
    %280 = vector.broadcast %cst_64 : f32 to vector<16x256xf32>
    %281 = arith.addf %280, %279 : vector<16x256xf32>
    %cst_65 = arith.constant 1.000000e+00 : f32
    %282 = vector.broadcast %cst_65 : f32 to vector<16x256xf32>
    %283 = arith.divf %282, %281 : vector<16x256xf32>
    %284 = arith.mulf %276, %283 : vector<16x256xf32>
    %c0_66 = arith.constant 0 : index
    %c0_67 = arith.constant 0 : index
    %c0_68 = arith.constant 0 : index
    %285 = vector.load %arg7[%c0_66, %c0_67, %c0_68] : memref<1x16x256xf32, #tpu.memory_space<vmem>>, vector<1x16x256xf32>
    %286 = vector.shape_cast %285 : vector<1x16x256xf32> to vector<16x256xf32>
    %287 = vector.shape_cast %284 : vector<16x256xf32> to vector<1x16x256xf32>
    tpu.vector_store %arg7[%c0_66, %c0_67, %c0_68], %287 {strides = array<i32>} : memref<1x16x256xf32, #tpu.memory_space<vmem>>, vector<1x16x256xf32>,
    return
  }
  func.func @transform_0(%arg0: i32) -> (i32, i32, i32) {
    %c0_i32 = arith.constant 0 : i32
    %c0_i32_0 = arith.constant 0 : i32
    %c0_i32_1 = arith.constant 0 : i32
    return %arg0, %c0_i32, %c0_i32_0 : i32, i32, i32
  }
  func.func @transform_1(%arg0: i32) -> (i32, i32) {
    %c0_i32 = arith.constant 0 : i32
    %c0_i32_0 = arith.constant 0 : i32
    %c0_i32_1 = arith.constant 0 : i32
    return %c0_i32, %c0_i32_0 : i32, i32
  }
  func.func @transform_2(%arg0: i32) -> (i32, i32) {
    %c0_i32 = arith.constant 0 : i32
    %c0_i32_0 = arith.constant 0 : i32
    %c0_i32_1 = arith.constant 0 : i32
    return %c0_i32, %c0_i32_0 : i32, i32
  }
  func.func @transform_3(%arg0: i32) -> (i32, i32) {
    %c0_i32 = arith.constant 0 : i32
    %c0_i32_0 = arith.constant 0 : i32
    %c0_i32_1 = arith.constant 0 : i32
    return %c0_i32, %c0_i32_0 : i32, i32
  }
  func.func @transform_4(%arg0: i32) -> (i32, i32) {
    %c0_i32 = arith.constant 0 : i32
    %c0_i32_0 = arith.constant 0 : i32
    %c0_i32_1 = arith.constant 0 : i32
    return %c0_i32, %c0_i32_0 : i32, i32
  }
  func.func @transform_5(%arg0: i32) -> (i32, i32) {
    %c0_i32 = arith.constant 0 : i32
    %c0_i32_0 = arith.constant 0 : i32
    %c0_i32_1 = arith.constant 0 : i32
    return %c0_i32, %c0_i32_0 : i32, i32
  }
  func.func @transform_6(%arg0: i32) -> (i32, i32, i32) {
    %c0_i32 = arith.constant 0 : i32
    %c0_i32_0 = arith.constant 0 : i32
    %c0_i32_1 = arith.constant 0 : i32
    return %arg0, %c0_i32, %c0_i32_0 : i32, i32, i32
  }
}

</mosaic_0001>

<llo_original>
// kernel: tpu_custom_call.1
$region0: #{tpu_custom_call.1}
  #allocation0 [shape = 'u32[]', space=smem, size = 0x4, offset = 0x4, fixed_abs, tag = 'smem constant byte address 0x4 - core index']
  #allocation1 [shape = 'u32[144,128]{1,0:T(1,128)}', space=vmem, size = 0x12000, scoped, tag = 'internal scratch']
  %s0 = inlined_call_operand.vmem [shape: f32[2,4,256], index: 0, kind: input, shape index: {}]
  %s1 = inlined_call_operand.hbm [shape: f32[16,36], index: 1, kind: input, shape index: {}]
  %s2 = inlined_call_operand.vmem [shape: f32[16,1], index: 2, kind: input, shape index: {}]
  %s3 = inlined_call_operand.vmem [shape: f32[16,1], index: 3, kind: input, shape index: {}]
  %s4 = inlined_call_operand.vmem [shape: f32[16,1], index: 4, kind: input, shape index: {}]
  %s5 = inlined_call_operand.vmem [shape: f32[9,256], index: 5, kind: input, shape index: {}]
  %s6 = inlined_call_operand.hbm [shape: f32[2,16,256], index: 6, kind: output, shape index: {}]
  %s7 = sld [smem:[#allocation0]]
  $region61: #{tpu_custom_call.1} parent=0
    _
  %s9 = ssub.s32 1, %s7
  %s10 = scalar_select 0, %s9, %s7
  $region1: #{tpu_custom_call.1} parent=0
    #allocation2 [shape = 'u8[8192]{0}', space=vmem, size = 0x2000, scoped, tag = 'input window, operand 1, single buffered']
    #allocation3 [shape = 's32[2]{0}', space=sflag, size = 0x8, scoped, tag = 'scoped memory for tpu_custom_call.1']
    #allocation4 [shape = 's32[2]{0}', space=sflag, size = 0x8, scoped, tag = 'scoped memory for tpu_custom_call.1']
    #allocation5 [shape = 'u8[32768]{0}', space=vmem, size = 0x8000, scoped, tag = 'output window, operand 0']
    %11 = vsyncpa [#allocation3], 0
    %12 = vsyncpa [#allocation4], 0
    %s13 = scalar_lea.sflag [#allocation4], 1
    %14 = vsyncpa %s13, 0
    loop: start=0, step=1, limit=4
    $region2: #{tpu_custom_call.1} parent=1 // loop_pre_header
      _
    $region3: #{tpu_custom_call.1} parent=1 // loop_header
      %s16 = sphi 0, %s20
      %p17 = scmp.ge.s32.totalorder %s16, 4
      %s26 = sphi 0, %s28
      %s29 = sphi 0, %s26
      %s30 = sphi 0, %s29
      %s46 = sphi 0, %s30
      %s50 = sphi 0, %s50
      %s52 = sphi 0, %s50
      %s53 = sphi 0, %s52
      %s67 = sphi 0, %s53
      %s71 = sphi 0, %s71
      %s73 = sphi 0, %s71
      %s74 = sphi 0, %s73
      %s88 = sphi 0, %s74
      %s92 = sphi 0, %s92
      %s94 = sphi 0, %s92
      %s95 = sphi 0, %s94
      %s109 = sphi 0, %s95
      %s113 = sphi 0, %s113
      %s115 = sphi 0, %s113
      %s116 = sphi 0, %s115
      %s130 = sphi 0, %s116
      %s134 = sphi 0, %s134
      %s136 = sphi 0, %s134
      %s137 = sphi 0, %s136
      %s151 = sphi 0, %s137
      %s157 = sphi 0, %s159
      %s160 = sphi 0, %s157
      %s161 = sphi 0, %s160
      %s177 = sphi 0, %s161
    $region4: #{tpu_custom_call.1} parent=1 // loop_header_branch
      %19 = sbr.rel (%p17) target = $region8
    $region5: #{tpu_custom_call.1} parent=1 // loop_body
      %s21 = ssub.s32 %s16, 1
      %s22 = ssub.s32 %s16, 2
      %s23 = sadd.s32 %s16, 1
      %s24 = ssub.s32 %s16, %s23
      %p25 = scmp.eq.s32.totalorder %s24, 0
      %s27 = sadd.s32 %s26, 1
      %s28 = scalar_select %p25, %s26, %s27
      %p31 = pneg %p25
      %p32 = scmp.eq.s32.totalorder %s16, 1
      %p33 = por %p31, %p32
      %p34 = scmp.ne.s32.totalorder %s26, %s29
      %p35 = scmp.eq.s32.totalorder %s16, 0
      %p36 = por %p34, %p35
      %p37 = scmp.ne.s32.totalorder %s26, %s29
      %p38 = scmp.eq.s32.totalorder %s21, 1
      %p39 = por %p37, %p38
      %p40 = scmp.ne.s32.totalorder %s29, %s30
      %p41 = scmp.eq.s32.totalorder %s21, 0
      %p42 = por %p40, %p41
      %p43 = scmp.ne.s32.totalorder %s29, %s30
      %p44 = scmp.eq.s32.totalorder %s22, 1
      %p45 = por %p43, %p44
      %p47 = scmp.ne.s32.totalorder %s30, %s46
      %p48 = scmp.eq.s32.totalorder %s22, 0
      %p49 = por %p47, %p48
      %s51 = sadd.s32 %s50, 1
      %p54 = scmp.eq.s32.totalorder %s16, 1
      %p55 = scmp.ne.s32.totalorder %s50, %s52
      %p56 = scmp.eq.s32.totalorder %s16, 0
      %p57 = por %p55, %p56
      %p58 = scmp.ne.s32.totalorder %s50, %s52
      %p59 = scmp.eq.s32.totalorder %s21, 1
      %p60 = por %p58, %p59
      %p61 = scmp.ne.s32.totalorder %s52, %s53
      %p62 = scmp.eq.s32.totalorder %s21, 0
      %p63 = por %p61, %p62
      %p64 = scmp.ne.s32.totalorder %s52, %s53
      %p65 = scmp.eq.s32.totalorder %s22, 1
      %p66 = por %p64, %p65
      %p68 = scmp.ne.s32.totalorder %s53, %s67
      %p69 = scmp.eq.s32.totalorder %s22, 0
      %p70 = por %p68, %p69
      %s72 = sadd.s32 %s71, 1
      %p75 = scmp.eq.s32.totalorder %s16, 1
      %p76 = scmp.ne.s32.totalorder %s71, %s73
      %p77 = scmp.eq.s32.totalorder %s16, 0
      %p78 = por %p76, %p77
      %p79 = scmp.ne.s32.totalorder %s71, %s73
      %p80 = scmp.eq.s32.totalorder %s21, 1
      %p81 = por %p79, %p80
      %p82 = scmp.ne.s32.totalorder %s73, %s74
      %p83 = scmp.eq.s32.totalorder %s21, 0
      %p84 = por %p82, %p83
      %p85 = scmp.ne.s32.totalorder %s73, %s74
      %p86 = scmp.eq.s32.totalorder %s22, 1
      %p87 = por %p85, %p86
      %p89 = scmp.ne.s32.totalorder %s74, %s88
      %p90 = scmp.eq.s32.totalorder %s22, 0
      %p91 = por %p89, %p90
      %s93 = sadd.s32 %s92, 1
      %p96 = scmp.eq.s32.totalorder %s16, 1
      %p97 = scmp.ne.s32.totalorder %s92, %s94
      %p98 = scmp.eq.s32.totalorder %s16, 0
      %p99 = por %p97, %p98
      %p100 = scmp.ne.s32.totalorder %s92, %s94
      %p101 = scmp.eq.s32.totalorder %s21, 1
      %p102 = por %p100, %p101
      %p103 = scmp.ne.s32.totalorder %s94, %s95
      %p104 = scmp.eq.s32.totalorder %s21, 0
      %p105 = por %p103, %p104
      %p106 = scmp.ne.s32.totalorder %s94, %s95
      %p107 = scmp.eq.s32.totalorder %s22, 1
      %p108 = por %p106, %p107
      %p110 = scmp.ne.s32.totalorder %s95, %s109
      %p111 = scmp.eq.s32.totalorder %s22, 0
      %p112 = por %p110, %p111
      %s114 = sadd.s32 %s113, 1
      %p117 = scmp.eq.s32.totalorder %s16, 1
      %p118 = scmp.ne.s32.totalorder %s113, %s115
      %p119 = scmp.eq.s32.totalorder %s16, 0
      %p120 = por %p118, %p119
      %p121 = scmp.ne.s32.totalorder %s113, %s115
      %p122 = scmp.eq.s32.totalorder %s21, 1
      %p123 = por %p121, %p122
      %p124 = scmp.ne.s32.totalorder %s115, %s116
      %p125 = scmp.eq.s32.totalorder %s21, 0
      %p126 = por %p124, %p125
      %p127 = scmp.ne.s32.totalorder %s115, %s116
      %p128 = scmp.eq.s32.totalorder %s22, 1
      %p129 = por %p127, %p128
      %p131 = scmp.ne.s32.totalorder %s116, %s130
      %p132 = scmp.eq.s32.totalorder %s22, 0
      %p133 = por %p131, %p132
      %s135 = sadd.s32 %s134, 1
      %p138 = scmp.eq.s32.totalorder %s16, 1
      %p139 = scmp.ne.s32.totalorder %s134, %s136
      %p140 = scmp.eq.s32.totalorder %s16, 0
      %p141 = por %p139, %p140
      %p142 = scmp.ne.s32.totalorder %s134, %s136
      %p143 = scmp.eq.s32.totalorder %s21, 1
      %p144 = por %p142, %p143
      %p145 = scmp.ne.s32.totalorder %s136, %s137
      %p146 = scmp.eq.s32.totalorder %s21, 0
      %p147 = por %p145, %p146
      %p148 = scmp.ne.s32.totalorder %s136, %s137
      %p149 = scmp.eq.s32.totalorder %s22, 1
      %p150 = por %p148, %p149
      %p152 = scmp.ne.s32.totalorder %s137, %s151
      %p153 = scmp.eq.s32.totalorder %s22, 0
      %p154 = por %p152, %p153
      %s155 = ssub.s32 %s16, %s23
      %p156 = scmp.eq.s32.totalorder %s155, 0
      %s158 = sadd.s32 %s157, 1
      %s159 = scalar_select %p156, %s157, %s158
      %p162 = pneg %p156
      %p163 = scmp.eq.s32.totalorder %s16, 1
      %p164 = por %p162, %p163
      %p165 = scmp.ne.s32.totalorder %s157, %s160
      %p166 = scmp.eq.s32.totalorder %s16, 0
      %p167 = por %p165, %p166
      %p168 = scmp.ne.s32.totalorder %s157, %s160
      %p169 = scmp.eq.s32.totalorder %s21, 1
      %p170 = por %p168, %p169
      %p171 = scmp.ne.s32.totalorder %s160, %s161
      %p172 = scmp.eq.s32.totalorder %s21, 0
      %p173 = por %p171, %p172
      %p174 = scmp.ne.s32.totalorder %s160, %s161
      %p175 = scmp.eq.s32.totalorder %s22, 1
      %p176 = por %p174, %p175
      %p178 = scmp.ne.s32.totalorder %s161, %s177
      %p179 = scmp.eq.s32.totalorder %s22, 0
      %p180 = por %p178, %p179
      %p181 = scmp.le.s32.totalorder 1, %s16
      %p182 = scmp.lt.s32.totalorder %s16, 3
      %p183 = pnand %p181, %p182
      %p184 = pneg %p183
      // Predicated region
      $region9: #{tpu_custom_call.1} parent=5 // pred_check
        _
      $region10: #{tpu_custom_call.1} parent=5 // pred_check_branch
        %186 = sbr.rel (%p183) target = $region12
      $region11: #{tpu_custom_call.1} parent=5 // pred_region
        %s187 = ssub.s32 %s16, 1
        // Predicated region
        $region13: #{tpu_custom_call.1} parent=11 // pred_check
          %p188 = pneg %p63
        $region14: #{tpu_custom_call.1} parent=11 // pred_check_branch
          %190 = sbr.rel (%p188) target = $region16
        $region15: #{tpu_custom_call.1} parent=11 // pred_region
          %s192 = ssub.s32 256, 256
          %193 = vsyncadd [#allocation3], %s192
          %s194 = sshll.u32 [#allocation2], 4
          %s195 = int_to_ptr.vmem [resolvable:$true] %s194
          %200 = dma.hbm_to_vmem [thread:$0]  %s1, 256, %s195, [#allocation3], 128, 128, 8
        $region16: #{tpu_custom_call.1} parent=11 // pred_fallthru
          _
        // Predicated region
        $region17: #{tpu_custom_call.1} parent=11 // pred_check
          %p201 = pneg %p84
        $region18: #{tpu_custom_call.1} parent=11 // pred_check_branch
          %203 = sbr.rel (%p201) target = $region20
        $region19: #{tpu_custom_call.1} parent=11 // pred_region
          _
        $region20: #{tpu_custom_call.1} parent=11 // pred_fallthru
          _
        // Predicated region
        $region21: #{tpu_custom_call.1} parent=11 // pred_check
          %p204 = pneg %p105
        $region22: #{tpu_custom_call.1} parent=11 // pred_check_branch
          %206 = sbr.rel (%p204) target = $region24
        $region23: #{tpu_custom_call.1} parent=11 // pred_region
          _
        $region24: #{tpu_custom_call.1} parent=11 // pred_fallthru
          _
        // Predicated region
        $region25: #{tpu_custom_call.1} parent=11 // pred_check
          %p207 = pneg %p126
        $region26: #{tpu_custom_call.1} parent=11 // pred_check_branch
          %209 = sbr.rel (%p207) target = $region28
        $region27: #{tpu_custom_call.1} parent=11 // pred_region
          _
        $region28: #{tpu_custom_call.1} parent=11 // pred_fallthru
          _
        // Predicated region
        $region29: #{tpu_custom_call.1} parent=11 // pred_check
          %p210 = pneg %p147
        $region30: #{tpu_custom_call.1} parent=11 // pred_check_branch
          %212 = sbr.rel (%p210) target = $region32
        $region31: #{tpu_custom_call.1} parent=11 // pred_region
          _
        $region32: #{tpu_custom_call.1} parent=11 // pred_fallthru
          _
      $region12: #{tpu_custom_call.1} parent=5 // pred_fallthru
        _
      %p213 = scmp.lt.s32.totalorder %s16, 2
      // Predicated region
      $region33: #{tpu_custom_call.1} parent=5 // pred_check
        %p214 = pneg %p213
      $region34: #{tpu_custom_call.1} parent=5 // pred_check_branch
        %216 = sbr.rel (%p214) target = $region36
      $region35: #{tpu_custom_call.1} parent=5 // pred_region
        // Predicated region
        $region37: #{tpu_custom_call.1} parent=35 // pred_check
          %p217 = pneg %p36
        $region38: #{tpu_custom_call.1} parent=35 // pred_check_branch
          %219 = sbr.rel (%p217) target = $region40
        $region39: #{tpu_custom_call.1} parent=35 // pred_region
          %p220 = scmp.lt.s32.totalorder %s16, 1
          %s221 = scalar_select %p220, %s16, 1
          %s222 = smul.addr %s221, 2
          %s223 = smul.addr %s222, 4
          %s224 = scalar_lea.vmem %s0, %s223
        $region40: #{tpu_custom_call.1} parent=35 // pred_fallthru
          _
      $region36: #{tpu_custom_call.1} parent=5 // pred_fallthru
        _
      %p225 = scmp.le.s32.totalorder 1, %s16
      %p226 = scmp.lt.s32.totalorder %s16, 3
      %p227 = pnand %p225, %p226
      %p228 = pneg %p227
      // Predicated region
      $region41: #{tpu_custom_call.1} parent=5 // pred_check
        _
      $region42: #{tpu_custom_call.1} parent=5 // pred_check_branch
        %230 = sbr.rel (%p227) target = $region44
      $region43: #{tpu_custom_call.1} parent=5 // pred_region
        %s231 = ssub.s32 %s16, 1
        // Predicated region
        $region45: #{tpu_custom_call.1} parent=43 // pred_check
          %p232 = pneg %p63
        $region46: #{tpu_custom_call.1} parent=43 // pred_check_branch
          %234 = sbr.rel (%p232) target = $region48
        $region47: #{tpu_custom_call.1} parent=43 // pred_region
          %235 = dma.done [#allocation3], 256
        $region48: #{tpu_custom_call.1} parent=43 // pred_fallthru
          _
        %p236 = scmp.lt.s32.totalorder %s21, 1
        %s237 = scalar_select %p236, %s21, 1
        %s238 = smul.addr %s237, 2
        %s239 = smul.addr %s238, 4
        %s240 = scalar_lea.vmem %s0, %s239
        %p241 = pneg %p42
        %p242 = pneg %p39
        %p243 = pneg %p63
        %p244 = pneg %p60
        %p245 = pneg %p84
        %p246 = pneg %p81
        %p247 = pneg %p105
        %p248 = pneg %p102
        %p249 = pneg %p126
        %p250 = pneg %p123
        %p251 = pneg %p147
        %p252 = pneg %p144
        %p253 = pneg %p173
        %p254 = pneg %p170
        %s255 = sand.u32 %s160, 1
        %s256 = scalar_lea.sflag [#allocation4], %s255
        %s257 = sand.u32 %s160, 1
        %s258 = smul.addr %s257, 32
        %s259 = scalar_lea.vmem [#allocation5], %s258
        %p260 = scmp.lt.s32.totalorder %s21, 1
        %s261 = scalar_select %p260, %s21, 1
        %s262 = smul.addr %s261, 2
        %s263 = smul.addr %s262, 4
        %s264 = scalar_lea.vmem %s0, %s263
        %v265 = vld [vmem:[#allocation2] sm:$0xff]
        %v266 = vld [vmem:[#allocation2 + $0x8] sm:$0xff]
        %v267 = vld [vmem:[%s2] sm:$0xff]
        %v268 = vld [vmem:[%s2 + $0x8] sm:$0xff]
        %v269 = vld [vmem:[%s3] sm:$0xff]
        %v270 = vld [vmem:[%s3 + $0x8] sm:$0xff]
        %v271 = vld [vmem:[%s4] sm:$0xff]
        %v272 = vld [vmem:[%s4 + $0x8] sm:$0xff]
        %v273 = vld [vmem:[%s5] sm:$0xff]
        %v274 = vld [vmem:[%s5 + $0x8] sm:$0xff]
        %v275 = vld [vmem:[%s5 + $0x10] sm:$0x1]
        %v276 = vld [vmem:[%s5 + $0x18] sm:$0x1]
        %v277 = vlaneseq
        %v278 = vshrl.u32 %v277, 7
        %v279 = vadd.s32 %v278, 8
        %v280 = vld [vmem:[%s264] sm:$0xff]
        %v282 = vcombine.high %v280, %v280
        %283 = vrot.lane.b32.xlu0 %v282, 17
        %v284 = vpop.permute.xlu0 %283
        %286 = vrot.lane.b32.xlu0 %v280, 17
        %v287 = vpop.permute.xlu0 %286
        %vm288 = vcmask 138240
        %v289 = vsel %vm288, %v287, %v284
        %v292 = vsel %vm288, %v284, %v287
        %v293 = vlaneseq
        %v294 = vshrl.u32 %v293, 7
        %v295 = vsub.s32 0, %v294
        %v296 = vrot.slane %v273, %v295
        %v297 = vlaneseq
        %v298 = vshrl.u32 %v297, 7
        %v299 = vsub.s32 0, %v298
        %v300 = vrot.slane %v274, %v299
        %v301 = vmul.f32 %v292, %v296
        %v302 = vmul.f32 %v289, %v300
        %303 = vrot.lane.b32.xlu0 %v282, 16
        %v304 = vpop.permute.xlu0 %303
        %306 = vrot.lane.b32.xlu0 %v280, 16
        %v307 = vpop.permute.xlu0 %306
        %vm308 = vcmask 130048
        %v309 = vsel %vm308, %v307, %v304
        %v312 = vsel %vm308, %v304, %v307
        %v313 = vlaneseq
        %v314 = vshrl.u32 %v313, 7
        %v315 = vsub.s32 1, %v314
        %v316 = vrot.slane %v273, %v315
        %v317 = vlaneseq
        %v318 = vshrl.u32 %v317, 7
        %v319 = vsub.s32 1, %v318
        %v320 = vrot.slane %v274, %v319
        %v321 = vmul.f32 %v312, %v316
        %v322 = vmul.f32 %v309, %v320
        %323 = vrot.lane.b32.xlu0 %v282, 15
        %v324 = vpop.permute.xlu0 %323
        %326 = vrot.lane.b32.xlu0 %v280, 15
        %v327 = vpop.permute.xlu0 %326
        %vm328 = vcmask 121856
        %v329 = vsel %vm328, %v327, %v324
        %v332 = vsel %vm328, %v324, %v327
        %v333 = vlaneseq
        %v334 = vshrl.u32 %v333, 7
        %v335 = vsub.s32 2, %v334
        %v336 = vrot.slane %v273, %v335
        %v337 = vlaneseq
        %v338 = vshrl.u32 %v337, 7
        %v339 = vsub.s32 2, %v338
        %v340 = vrot.slane %v274, %v339
        %v341 = vmul.f32 %v332, %v336
        %v342 = vmul.f32 %v329, %v340
        %343 = vrot.lane.b32.xlu0 %v282, 1
        %v344 = vpop.permute.xlu0 %343
        %346 = vrot.lane.b32.xlu0 %v280, 1
        %v347 = vpop.permute.xlu0 %346
        %vm348 = vcmask 7168
        %v349 = vsel %vm348, %v347, %v344
        %v352 = vsel %vm348, %v344, %v347
        %v353 = vlaneseq
        %v354 = vshrl.u32 %v353, 7
        %v355 = vsub.s32 3, %v354
        %v356 = vrot.slane %v273, %v355
        %v357 = vlaneseq
        %v358 = vshrl.u32 %v357, 7
        %v359 = vsub.s32 3, %v358
        %v360 = vrot.slane %v274, %v359
        %v361 = vmul.f32 %v352, %v356
        %v362 = vmul.f32 %v349, %v360
        %v363 = vlaneseq
        %v364 = vshrl.u32 %v363, 7
        %v365 = vsub.s32 4, %v364
        %v366 = vrot.slane %v273, %v365
        %v367 = vlaneseq
        %v368 = vshrl.u32 %v367, 7
        %v369 = vsub.s32 4, %v368
        %v370 = vrot.slane %v274, %v369
        %v373 = vcombine.low %v366, %v370
        %v375 = vmul.f32 %v280, %v373
        %376 = vrot.lane.b32.xlu0 %v280, 127
        %v377 = vpop.permute.xlu0 %376
        %378 = vrot.lane.b32.xlu0 %v282, 127
        %v379 = vpop.permute.xlu0 %378
        %vm380 = vcmask 1039360
        %v381 = vsel %vm380, %v377, %v379
        %v385 = vsel %vm380, %v379, %v377
        %v386 = vlaneseq
        %v387 = vshrl.u32 %v386, 7
        %v388 = vsub.s32 5, %v387
        %v389 = vrot.slane %v273, %v388
        %v390 = vlaneseq
        %v391 = vshrl.u32 %v390, 7
        %v392 = vsub.s32 5, %v391
        %v393 = vrot.slane %v274, %v392
        %v394 = vmul.f32 %v381, %v389
        %v395 = vmul.f32 %v385, %v393
        %396 = vrot.lane.b32.xlu0 %v280, 113
        %v397 = vpop.permute.xlu0 %396
        %398 = vrot.lane.b32.xlu0 %v282, 113
        %v399 = vpop.permute.xlu0 %398
        %vm400 = vcmask 924672
        %v401 = vsel %vm400, %v397, %v399
        %v405 = vsel %vm400, %v399, %v397
        %v406 = vlaneseq
        %v407 = vshrl.u32 %v406, 7
        %v408 = vsub.s32 6, %v407
        %v409 = vrot.slane %v273, %v408
        %v410 = vlaneseq
        %v411 = vshrl.u32 %v410, 7
        %v412 = vsub.s32 6, %v411
        %v413 = vrot.slane %v274, %v412
        %v414 = vmul.f32 %v401, %v409
        %v415 = vmul.f32 %v405, %v413
        %416 = vrot.lane.b32.xlu0 %v280, 112
        %v417 = vpop.permute.xlu0 %416
        %418 = vrot.lane.b32.xlu0 %v282, 112
        %v419 = vpop.permute.xlu0 %418
        %vm420 = vcmask 916480
        %v421 = vsel %vm420, %v417, %v419
        %v425 = vsel %vm420, %v419, %v417
        %v426 = vlaneseq
        %v427 = vshrl.u32 %v426, 7
        %v428 = vsub.s32 7, %v427
        %v429 = vrot.slane %v273, %v428
        %v430 = vlaneseq
        %v431 = vshrl.u32 %v430, 7
        %v432 = vsub.s32 7, %v431
        %v433 = vrot.slane %v274, %v432
        %v434 = vmul.f32 %v421, %v429
        %v435 = vmul.f32 %v425, %v433
        %436 = vrot.lane.b32.xlu0 %v280, 111
        %v437 = vpop.permute.xlu0 %436
        %438 = vrot.lane.b32.xlu0 %v282, 111
        %v439 = vpop.permute.xlu0 %438
        %vm440 = vcmask 908288
        %v441 = vsel %vm440, %v437, %v439
        %v445 = vsel %vm440, %v439, %v437
        %v446 = vlaneseq
        %v447 = vshrl.u32 %v446, 7
        %v448 = vsub.s32 0, %v447
        %v449 = vrot.slane %v275, %v448
        %v450 = vlaneseq
        %v451 = vshrl.u32 %v450, 7
        %v452 = vsub.s32 0, %v451
        %v453 = vrot.slane %v276, %v452
        %v454 = vmul.f32 %v441, %v449
        %v455 = vmul.f32 %v445, %v453
        %v458 = vrot.slane %v321, 4
        %v459 = vrot.slane %v322, 4
        %v464 = vrot.slane %v361, 4
        %v465 = vrot.slane %v362, 4
        %v469 = vcombine.high %v375, %v375
        %v473 = vrot.slane %v394, 4
        %v474 = vrot.slane %v395, 4
        %v479 = vrot.slane %v434, 4
        %v480 = vrot.slane %v435, 4
        %vm483 = vcmask 1043456
        %v484 = vsel %vm483, %v301, %v458
        %v485 = vsel %vm483, %v302, %v459
        %v486 = vsel %vm483, %v341, %v464
        %v487 = vsel %vm483, %v342, %v465
        %v488 = vsel %vm483, %v375, %v473
        %v489 = vsel %vm483, %v469, %v474
        %v490 = vsel %vm483, %v414, %v479
        %v491 = vsel %vm483, %v415, %v480
        %493 = vset.pattern.permute.xlu0 0
        %494 = vperm.xlu0 %493, %v267
        %v495 = vpop.permute.xlu0 %494
        %498 = vset.pattern.permute.xlu0 0
        %499 = vperm.xlu0 %498, %v268
        %v500 = vpop.permute.xlu0 %499
        %vm502 = vcmask 293888
        %v504 = vsel %vm502, %v265, 0
        %v507 = vsel %vm502, %v266, 0
        %v510 = vsel %vm483, %v454, 0
        %v513 = vsel %vm483, %v455, 0
        %515 = vmatprep.subr.mxu0 0.0
        %516 = vmatpush1.msra.mxu0 0.0
        %517 = vmatprep.subr.mxu0 0.0
        %518 = vmatpush1.msra.mxu0 0.0
        %519 = vmatprep.subr.mxu0 0.0
        %520 = vmatpush1.msra.mxu0 0.0
        %521 = vmatprep.subr.mxu0 0.0
        %522 = vmatpush1.msra.mxu0 0.0
        %523 = vmatprep.subr.mxu0 0.0
        %524 = vmatpush1.msra.mxu0 0.0
        %525 = vmatprep.subr.mxu0 0.0
        %526 = vmatpush1.msra.mxu0 0.0
        %527 = vmatprep.subr.mxu0 0.0
        %528 = vmatpush1.msra.mxu0 0.0
        %529 = vmatprep.subr.mxu0 0.0
        %530 = vmatpush1.msra.mxu0 0.0
        %531 = vmatprep.subr.mxu0 0.0
        %532 = vmatpush1.msra.mxu0 0.0
        %533 = vmatprep.subr.mxu0 0.0
        %534 = vmatpush1.msra.mxu0 0.0
        %535 = vmatprep.subr.mxu0 0.0
        %536 = vmatpush1.msra.mxu0 0.0
        %537 = vmatprep.subr.mxu0 %v513
        %538 = vmatpush1.msra.mxu0 %v510
        %539 = vmatprep.subr.mxu0 %v491
        %540 = vmatpush1.msra.mxu0 %v490
        %541 = vmatprep.subr.mxu0 %v489
        %542 = vmatpush1.msra.mxu0 %v488
        %543 = vmatprep.subr.mxu0 %v487
        %544 = vmatpush1.msra.mxu0 %v486
        %545 = vmatprep.subr.mxu0 %v485
        %546 = vmatpush1.msra.mxu0 %v484
        %547 = vmatprep.subr.mxu0 0.0
        %548 = vmatpush2.msra.mxu0 0.0
        %549 = vmatprep.subr.mxu0 0.0
        %550 = vmatpush2.msra.mxu0 0.0
        %551 = vmatprep.subr.mxu0 0.0
        %552 = vmatpush2.msra.mxu0 0.0
        %553 = vmatprep.subr.mxu0 0.0
        %554 = vmatpush2.msra.mxu0 0.0
        %555 = vmatprep.subr.mxu0 0.0
        %556 = vmatpush2.msra.mxu0 0.0
        %557 = vmatprep.subr.mxu0 0.0
        %558 = vmatpush2.msra.mxu0 0.0
        %559 = vmatprep.subr.mxu0 0.0
        %560 = vmatpush2.msra.mxu0 0.0
        %561 = vmatprep.subr.mxu0 0.0
        %562 = vmatpush2.msra.mxu0 0.0
        %563 = vmatprep.subr.mxu0 0.0
        %564 = vmatpush2.msra.mxu0 0.0
        %565 = vmatprep.subr.mxu0 0.0
        %566 = vmatpush2.msra.mxu0 0.0
        %567 = vmatprep.subr.mxu0 0.0
        %568 = vmatpush2.msra.mxu0 0.0
        %569 = vmatprep.subr.mxu0 0.0
        %570 = vmatpush2.msra.mxu0 0.0
        %571 = vmatprep.subr.mxu0 0.0
        %572 = vmatpush2.msra.mxu0 0.0
        %573 = vmatprep.subr.mxu0 0.0
        %574 = vmatpush2.msra.mxu0 0.0
        %575 = vmatprep.subr.mxu0 0.0
        %576 = vmatpush2.msra.mxu0 0.0
        %577 = vmatprep.subr.mxu0 0.0
        %578 = vmatpush2.msra.mxu0 0.0
        %579 = vmatprep.mubr.f32.mxu0 0.0
        %580 = vmatmul.mubr.f32.gmra.mxu0 %v504
        %v581 = vpop.f32.mrf.mxu0
        %v582 = vadd.f32 %v495, %v581
        %v583 = vpop.f32.mrf.mxu0
        %v584 = vadd.f32 %v495, %v583
        %585 = vmatprep.mubr.f32.mxu0 0.0
        %586 = vmatmul.mubr.f32.gmra.mxu0 %v507
        %v587 = vpop.f32.mrf.mxu0
        %v588 = vadd.f32 %v500, %v587
        %v589 = vpop.f32.mrf.mxu0
        %v590 = vadd.f32 %v500, %v589
        %591 = vdwg.mxu0
        %v592 = vadd.f32 %v582, %v584
        %593 = vadd.xlane.f32.xlu0 %v592
        %v594 = vpop.xlane.xlu0 %593
        %v595 = vadd.f32 %v588, %v590
        %596 = vadd.xlane.f32.xlu0 %v595
        %v597 = vpop.xlane.xlu0 %596
        %v598 = vmul.f32 %v582, %v582
        %v599 = vmul.f32 %v584, %v584
        %v600 = vmul.f32 %v588, %v588
        %v601 = vmul.f32 %v590, %v590
        %v602 = vadd.f32 %v598, %v599
        %603 = vadd.xlane.f32.xlu0 %v602
        %v604 = vpop.xlane.xlu0 %603
        %v605 = vadd.f32 %v600, %v601
        %606 = vadd.xlane.f32.xlu0 %v605
        %v607 = vpop.xlane.xlu0 %606
        %vm608 = vcmask 1024
        %v609 = vsel %vm608, %v594, 0.0
        %610 = vadd.xlane.f32.xlu0 %v609
        %v611 = vpop.xlane.xlu0 %610
        %v612 = vrot.slane %v611, 4
        %v613 = vadd.f32 %v611, %v612
        %v614 = vrot.slane %v613, 2
        %v615 = vadd.f32 %v613, %v614
        %v616 = vrot.slane %v615, 1
        %v617 = vadd.f32 %v615, %v616
        %s618 = vtos %v617
        %s619 = smul.f32 %s618, 0.001953125
        %v620 = vsel %vm608, %v604, 0.0
        %621 = vadd.xlane.f32.xlu0 %v620
        %v622 = vpop.xlane.xlu0 %621
        %v623 = vrot.slane %v622, 4
        %v624 = vadd.f32 %v622, %v623
        %v625 = vrot.slane %v624, 2
        %v626 = vadd.f32 %v624, %v625
        %v627 = vrot.slane %v626, 1
        %v628 = vadd.f32 %v626, %v627
        %s629 = vtos %v628
        %s630 = smul.f32 %s629, 0.001953125
        %s631 = smul.f32 %s619, %s619
        %s632 = ssub.f32 %s630, %s631
        %s633 = sadd.f32 %s632, 1e-05
        %v634 = vstv %s633
        %v635 = vrsqrt.pop %v634
        %s636 = vtos %v635
        %vm637 = vcmp.ge.s32.totalorder %v278, 0
        %vm638 = vcmp.ge.s32.totalorder %v279, 0
        %vm639 = vcmp.lt.s32.totalorder %v278, 2
        %vm640 = vcmp.lt.s32.totalorder %v279, 2
        %vm641 = vmand %vm637, %vm639
        %vm642 = vmand %vm638, %vm640
        %v643 = vstv %s619
        %v644 = vsel %vm641, %v643, 0.0
        %v645 = vsel %vm642, %v643, 0.0
        %v646 = vstv %s636
        %v647 = vsel %vm641, %v646, 0.0
        %v648 = vsel %vm642, %v646, 0.0
        %v650 = vrot.slane %v594, 2
        %v652 = vsel %vm608, %v650, 0.0
        %653 = vadd.xlane.f32.xlu0 %v652
        %v654 = vpop.xlane.xlu0 %653
        %v655 = vrot.slane %v654, 4
        %v656 = vadd.f32 %v654, %v655
        %v657 = vrot.slane %v656, 2
        %v658 = vadd.f32 %v656, %v657
        %v659 = vrot.slane %v658, 1
        %v660 = vadd.f32 %v658, %v659
        %s661 = vtos %v660
        %s662 = smul.f32 %s661, 0.001953125
        %v664 = vrot.slane %v604, 2
        %v666 = vsel %vm608, %v664, 0.0
        %667 = vadd.xlane.f32.xlu0 %v666
        %v668 = vpop.xlane.xlu0 %667
        %v669 = vrot.slane %v668, 4
        %v670 = vadd.f32 %v668, %v669
        %v671 = vrot.slane %v670, 2
        %v672 = vadd.f32 %v670, %v671
        %v673 = vrot.slane %v672, 1
        %v674 = vadd.f32 %v672, %v673
        %s675 = vtos %v674
        %s676 = smul.f32 %s675, 0.001953125
        %s677 = smul.f32 %s662, %s662
        %s678 = ssub.f32 %s676, %s677
        %s679 = sadd.f32 %s678, 1e-05
        %v680 = vstv %s679
        %v681 = vrsqrt.pop %v680
        %s682 = vtos %v681
        %vm683 = vcmp.ge.s32.totalorder %v278, 2
        %vm684 = vcmp.ge.s32.totalorder %v279, 2
        %vm685 = vcmp.lt.s32.totalorder %v278, 4
        %vm686 = vcmp.lt.s32.totalorder %v279, 4
        %vm687 = vmand %vm683, %vm685
        %vm688 = vmand %vm684, %vm686
        %v689 = vstv %s662
        %v690 = vsel %vm687, %v689, %v644
        %v691 = vsel %vm688, %v689, %v645
        %v692 = vstv %s682
        %v693 = vsel %vm687, %v692, %v647
        %v694 = vsel %vm688, %v692, %v648
        %v695 = vrot.slane %v594, 4
        %v697 = vsel %vm608, %v695, 0.0
        %698 = vadd.xlane.f32.xlu0 %v697
        %v699 = vpop.xlane.xlu0 %698
        %v700 = vrot.slane %v699, 4
        %v701 = vadd.f32 %v699, %v700
        %v702 = vrot.slane %v701, 2
        %v703 = vadd.f32 %v701, %v702
        %v704 = vrot.slane %v703, 1
        %v705 = vadd.f32 %v703, %v704
        %s706 = vtos %v705
        %s707 = smul.f32 %s706, 0.001953125
        %v708 = vrot.slane %v604, 4
        %v710 = vsel %vm608, %v708, 0.0
        %711 = vadd.xlane.f32.xlu0 %v710
        %v712 = vpop.xlane.xlu0 %711
        %v713 = vrot.slane %v712, 4
        %v714 = vadd.f32 %v712, %v713
        %v715 = vrot.slane %v714, 2
        %v716 = vadd.f32 %v714, %v715
        %v717 = vrot.slane %v716, 1
        %v718 = vadd.f32 %v716, %v717
        %s719 = vtos %v718
        %s720 = smul.f32 %s719, 0.001953125
        %s721 = smul.f32 %s707, %s707
        %s722 = ssub.f32 %s720, %s721
        %s723 = sadd.f32 %s722, 1e-05
        %v724 = vstv %s723
        %v725 = vrsqrt.pop %v724
        %s726 = vtos %v725
        %vm727 = vcmp.ge.s32.totalorder %v278, 4
        %vm728 = vcmp.ge.s32.totalorder %v279, 4
        %vm729 = vcmp.lt.s32.totalorder %v278, 6
        %vm730 = vcmp.lt.s32.totalorder %v279, 6
        %vm731 = vmand %vm727, %vm729
        %vm732 = vmand %vm728, %vm730
        %v733 = vstv %s707
        %v734 = vsel %vm731, %v733, %v690
        %v735 = vsel %vm732, %v733, %v691
        %v736 = vstv %s726
        %v737 = vsel %vm731, %v736, %v693
        %v738 = vsel %vm732, %v736, %v694
        %v739 = vrot.slane %v594, 6
        %v741 = vsel %vm608, %v739, 0.0
        %742 = vadd.xlane.f32.xlu0 %v741
        %v743 = vpop.xlane.xlu0 %742
        %v744 = vrot.slane %v743, 4
        %v745 = vadd.f32 %v743, %v744
        %v746 = vrot.slane %v745, 2
        %v747 = vadd.f32 %v745, %v746
        %v748 = vrot.slane %v747, 1
        %v749 = vadd.f32 %v747, %v748
        %s750 = vtos %v749
        %s751 = smul.f32 %s750, 0.001953125
        %v752 = vrot.slane %v604, 6
        %v754 = vsel %vm608, %v752, 0.0
        %755 = vadd.xlane.f32.xlu0 %v754
        %v756 = vpop.xlane.xlu0 %755
        %v757 = vrot.slane %v756, 4
        %v758 = vadd.f32 %v756, %v757
        %v759 = vrot.slane %v758, 2
        %v760 = vadd.f32 %v758, %v759
        %v761 = vrot.slane %v760, 1
        %v762 = vadd.f32 %v760, %v761
        %s763 = vtos %v762
        %s764 = smul.f32 %s763, 0.001953125
        %s765 = smul.f32 %s751, %s751
        %s766 = ssub.f32 %s764, %s765
        %s767 = sadd.f32 %s766, 1e-05
        %v768 = vstv %s767
        %v769 = vrsqrt.pop %v768
        %s770 = vtos %v769
        %vm771 = vcmp.ge.s32.totalorder %v278, 6
        %vm772 = vcmp.ge.s32.totalorder %v279, 6
        %vm773 = vcmp.lt.s32.totalorder %v278, 8
        %vm774 = vcmp.lt.s32.totalorder %v279, 8
        %vm775 = vmand %vm771, %vm773
        %vm776 = vmand %vm772, %vm774
        %v777 = vstv %s751
        %v778 = vsel %vm775, %v777, %v734
        %v779 = vsel %vm776, %v777, %v735
        %v780 = vstv %s770
        %v781 = vsel %vm775, %v780, %v737
        %v782 = vsel %vm776, %v780, %v738
        %v783 = vsel %vm608, %v597, 0.0
        %784 = vadd.xlane.f32.xlu0 %v783
        %v785 = vpop.xlane.xlu0 %784
        %v786 = vrot.slane %v785, 4
        %v787 = vadd.f32 %v785, %v786
        %v788 = vrot.slane %v787, 2
        %v789 = vadd.f32 %v787, %v788
        %v790 = vrot.slane %v789, 1
        %v791 = vadd.f32 %v789, %v790
        %s792 = vtos %v791
        %s793 = smul.f32 %s792, 0.001953125
        %v794 = vsel %vm608, %v607, 0.0
        %795 = vadd.xlane.f32.xlu0 %v794
        %v796 = vpop.xlane.xlu0 %795
        %v797 = vrot.slane %v796, 4
        %v798 = vadd.f32 %v796, %v797
        %v799 = vrot.slane %v798, 2
        %v800 = vadd.f32 %v798, %v799
        %v801 = vrot.slane %v800, 1
        %v802 = vadd.f32 %v800, %v801
        %s803 = vtos %v802
        %s804 = smul.f32 %s803, 0.001953125
        %s805 = smul.f32 %s793, %s793
        %s806 = ssub.f32 %s804, %s805
        %s807 = sadd.f32 %s806, 1e-05
        %v808 = vstv %s807
        %v809 = vrsqrt.pop %v808
        %s810 = vtos %v809
        %vm811 = vcmp.ge.s32.totalorder %v278, 8
        %vm812 = vcmp.ge.s32.totalorder %v279, 8
        %vm813 = vcmp.lt.s32.totalorder %v278, 10
        %vm814 = vcmp.lt.s32.totalorder %v279, 10
        %vm815 = vmand %vm811, %vm813
        %vm816 = vmand %vm812, %vm814
        %v817 = vstv %s793
        %v818 = vsel %vm815, %v817, %v778
        %v819 = vsel %vm816, %v817, %v779
        %v820 = vstv %s810
        %v821 = vsel %vm815, %v820, %v781
        %v822 = vsel %vm816, %v820, %v782
        %v824 = vrot.slane %v597, 2
        %v826 = vsel %vm608, %v824, 0.0
        %827 = vadd.xlane.f32.xlu0 %v826
        %v828 = vpop.xlane.xlu0 %827
        %v829 = vrot.slane %v828, 4
        %v830 = vadd.f32 %v828, %v829
        %v831 = vrot.slane %v830, 2
        %v832 = vadd.f32 %v830, %v831
        %v833 = vrot.slane %v832, 1
        %v834 = vadd.f32 %v832, %v833
        %s835 = vtos %v834
        %s836 = smul.f32 %s835, 0.001953125
        %v838 = vrot.slane %v607, 2
        %v840 = vsel %vm608, %v838, 0.0
        %841 = vadd.xlane.f32.xlu0 %v840
        %v842 = vpop.xlane.xlu0 %841
        %v843 = vrot.slane %v842, 4
        %v844 = vadd.f32 %v842, %v843
        %v845 = vrot.slane %v844, 2
        %v846 = vadd.f32 %v844, %v845
        %v847 = vrot.slane %v846, 1
        %v848 = vadd.f32 %v846, %v847
        %s849 = vtos %v848
        %s850 = smul.f32 %s849, 0.001953125
        %s851 = smul.f32 %s836, %s836
        %s852 = ssub.f32 %s850, %s851
        %s853 = sadd.f32 %s852, 1e-05
        %v854 = vstv %s853
        %v855 = vrsqrt.pop %v854
        %s856 = vtos %v855
        %vm857 = vcmp.ge.s32.totalorder %v278, 10
        %vm858 = vcmp.ge.s32.totalorder %v279, 10
        %vm859 = vcmp.lt.s32.totalorder %v278, 12
        %vm860 = vcmp.lt.s32.totalorder %v279, 12
        %vm861 = vmand %vm857, %vm859
        %vm862 = vmand %vm858, %vm860
        %v863 = vstv %s836
        %v864 = vsel %vm861, %v863, %v818
        %v865 = vsel %vm862, %v863, %v819
        %v866 = vstv %s856
        %v867 = vsel %vm861, %v866, %v821
        %v868 = vsel %vm862, %v866, %v822
        %v869 = vrot.slane %v597, 4
        %v871 = vsel %vm608, %v869, 0.0
        %872 = vadd.xlane.f32.xlu0 %v871
        %v873 = vpop.xlane.xlu0 %872
        %v874 = vrot.slane %v873, 4
        %v875 = vadd.f32 %v873, %v874
        %v876 = vrot.slane %v875, 2
        %v877 = vadd.f32 %v875, %v876
        %v878 = vrot.slane %v877, 1
        %v879 = vadd.f32 %v877, %v878
        %s880 = vtos %v879
        %s881 = smul.f32 %s880, 0.001953125
        %v882 = vrot.slane %v607, 4
        %v884 = vsel %vm608, %v882, 0.0
        %885 = vadd.xlane.f32.xlu0 %v884
        %v886 = vpop.xlane.xlu0 %885
        %v887 = vrot.slane %v886, 4
        %v888 = vadd.f32 %v886, %v887
        %v889 = vrot.slane %v888, 2
        %v890 = vadd.f32 %v888, %v889
        %v891 = vrot.slane %v890, 1
        %v892 = vadd.f32 %v890, %v891
        %s893 = vtos %v892
        %s894 = smul.f32 %s893, 0.001953125
        %s895 = smul.f32 %s881, %s881
        %s896 = ssub.f32 %s894, %s895
        %s897 = sadd.f32 %s896, 1e-05
        %v898 = vstv %s897
        %v899 = vrsqrt.pop %v898
        %s900 = vtos %v899
        %vm901 = vcmp.ge.s32.totalorder %v278, 12
        %vm902 = vcmp.ge.s32.totalorder %v279, 12
        %vm903 = vcmp.lt.s32.totalorder %v278, 14
        %vm904 = vcmp.lt.s32.totalorder %v279, 14
        %vm905 = vmand %vm901, %vm903
        %vm906 = vmand %vm902, %vm904
        %v907 = vstv %s881
        %v908 = vsel %vm905, %v907, %v864
        %v909 = vsel %vm906, %v907, %v865
        %v910 = vstv %s900
        %v911 = vsel %vm905, %v910, %v867
        %v912 = vsel %vm906, %v910, %v868
        %v913 = vrot.slane %v597, 6
        %v915 = vsel %vm608, %v913, 0.0
        %916 = vadd.xlane.f32.xlu0 %v915
        %v917 = vpop.xlane.xlu0 %916
        %v918 = vrot.slane %v917, 4
        %v919 = vadd.f32 %v917, %v918
        %v920 = vrot.slane %v919, 2
        %v921 = vadd.f32 %v919, %v920
        %v922 = vrot.slane %v921, 1
        %v923 = vadd.f32 %v921, %v922
        %s924 = vtos %v923
        %s925 = smul.f32 %s924, 0.001953125
        %v926 = vrot.slane %v607, 6
        %v928 = vsel %vm608, %v926, 0.0
        %929 = vadd.xlane.f32.xlu0 %v928
        %v930 = vpop.xlane.xlu0 %929
        %v931 = vrot.slane %v930, 4
        %v932 = vadd.f32 %v930, %v931
        %v933 = vrot.slane %v932, 2
        %v934 = vadd.f32 %v932, %v933
        %v935 = vrot.slane %v934, 1
        %v936 = vadd.f32 %v934, %v935
        %s937 = vtos %v936
        %s938 = smul.f32 %s937, 0.001953125
        %s939 = smul.f32 %s925, %s925
        %s940 = ssub.f32 %s938, %s939
        %s941 = sadd.f32 %s940, 1e-05
        %v942 = vstv %s941
        %v943 = vrsqrt.pop %v942
        %s944 = vtos %v943
        %vm945 = vcmp.ge.s32.totalorder %v278, 14
        %vm946 = vcmp.ge.s32.totalorder %v279, 14
        %vm947 = vcmp.lt.s32.totalorder %v278, 16
        %vm948 = vcmp.lt.s32.totalorder %v279, 16
        %vm949 = vmand %vm945, %vm947
        %vm950 = vmand %vm946, %vm948
        %v951 = vstv %s925
        %v952 = vsel %vm949, %v951, %v908
        %v953 = vsel %vm950, %v951, %v909
        %v954 = vstv %s944
        %v955 = vsel %vm949, %v954, %v911
        %v956 = vsel %vm950, %v954, %v912
        %v957 = vmul.f32 %v269, %v955
        %v958 = vmul.f32 %v270, %v956
        %v959 = vmul.f32 %v952, %v957
        %v960 = vmul.f32 %v953, %v958
        %v961 = vsub.f32 %v271, %v959
        %v962 = vsub.f32 %v272, %v960
        %964 = vset.pattern.permute.xlu0 0
        %965 = vperm.xlu0 %964, %v957
        %v966 = vpop.permute.xlu0 %965
        %969 = vset.pattern.permute.xlu0 0
        %970 = vperm.xlu0 %969, %v958
        %v971 = vpop.permute.xlu0 %970
        %v973 = vmul.f32 %v582, %v966
        %v974 = vmul.f32 %v584, %v966
        %v975 = vmul.f32 %v588, %v971
        %v976 = vmul.f32 %v590, %v971
        %978 = vset.pattern.permute.xlu0 0
        %979 = vperm.xlu0 %978, %v961
        %v980 = vpop.permute.xlu0 %979
        %983 = vset.pattern.permute.xlu0 0
        %984 = vperm.xlu0 %983, %v962
        %v985 = vpop.permute.xlu0 %984
        %v987 = vadd.f32 %v973, %v980
        %v988 = vadd.f32 %v974, %v980
        %v989 = vadd.f32 %v975, %v985
        %v990 = vadd.f32 %v976, %v985
        %v991 = vsub.f32 0.0, %v987
        %v992 = vsub.f32 0.0, %v988
        %v993 = vsub.f32 0.0, %v989
        %v994 = vsub.f32 0.0, %v990
        %v995 = vmul.f32 %v991, 1.442695
        %v996 = vpow.pop %v995
        %v997 = vmul.f32 %v992, 1.442695
        %v998 = vpow.pop %v997
        %v999 = vmul.f32 %v993, 1.442695
        %v1000 = vpow.pop %v999
        %v1001 = vmul.f32 %v994, 1.442695
        %v1002 = vpow.pop %v1001
        %v1003 = vadd.f32 %v996, 1.0
        %v1004 = vadd.f32 %v998, 1.0
        %v1005 = vadd.f32 %v1000, 1.0
        %v1006 = vadd.f32 %v1002, 1.0
        %v1007 = vrcp.pop %v1003
        %v1008 = vmul.f32 1.0, %v1007
        %v1009 = vrcp.pop %v1004
        %v1010 = vmul.f32 1.0, %v1009
        %v1011 = vrcp.pop %v1005
        %v1012 = vmul.f32 1.0, %v1011
        %v1013 = vrcp.pop %v1006
        %v1014 = vmul.f32 1.0, %v1013
        %v1015 = vmul.f32 %v987, %v1008
        %v1016 = vmul.f32 %v988, %v1010
        %v1017 = vmul.f32 %v989, %v1012
        %v1018 = vmul.f32 %v990, %v1014
        %1019 = vst [vmem:[%s259] sm:$0xff] %v1015
        %1020 = vst [vmem:[%s259 + $0x8] sm:$0xff] %v1016
        %1021 = vst [vmem:[%s259 + $0x10] sm:$0xff] %v1017
        %1022 = vst [vmem:[%s259 + $0x18] sm:$0xff] %v1018
        %s1023 = sand.u32 %s160, 1
        %s1024 = scalar_lea.sflag [#allocation4], %s1023
        %s1025 = sand.u32 %s160, 1
        %s1026 = smul.addr %s1025, 32
        %s1027 = scalar_lea.vmem [#allocation5], %s1026
        // Predicated region
        $region49: #{tpu_custom_call.1} parent=43 // pred_check
          %p1028 = pneg %p170
        $region50: #{tpu_custom_call.1} parent=43 // pred_check_branch
          %1030 = sbr.rel (%p1028) target = $region52
        $region51: #{tpu_custom_call.1} parent=43 // pred_region
          %s1032 = ssub.s32 512, 512
          %1033 = vsyncadd %s1024, %s1032
          %s1034 = smul.addr %s21, 4
          %s1035 = smul.addr %s1034, 128
          %s1036 = scalar_lea.hbm %s6, %s1035
          %s1037 = sshll.u32 %s1027, 4
          %s1038 = int_to_ptr.vmem [resolvable:$true] %s1037
          %1043 = dma.vmem_to_hbm [thread:$0]  %s1038, 512, %s1036, %s1024, 256, 256, 16
        $region52: #{tpu_custom_call.1} parent=43 // pred_fallthru
          _
      $region44: #{tpu_custom_call.1} parent=5 // pred_fallthru
        _
      %p1044 = scmp.le.s32.totalorder 2, %s16
      // Predicated region
      $region53: #{tpu_custom_call.1} parent=5 // pred_check
        %p1045 = pneg %p1044
      $region54: #{tpu_custom_call.1} parent=5 // pred_check_branch
        %1047 = sbr.rel (%p1045) target = $region56
      $region55: #{tpu_custom_call.1} parent=5 // pred_region
        %s1048 = ssub.s32 %s16, 2
        // Predicated region
        $region57: #{tpu_custom_call.1} parent=55 // pred_check
          %p1049 = pneg %p176
        $region58: #{tpu_custom_call.1} parent=55 // pred_check_branch
          %1051 = sbr.rel (%p1049) target = $region60
        $region59: #{tpu_custom_call.1} parent=55 // pred_region
          %s1052 = sand.u32 %s161, 1
          %s1053 = scalar_lea.sflag [#allocation4], %s1052
          %s1054 = sand.u32 %s161, 1
          %s1055 = smul.addr %s1054, 32
          %s1056 = scalar_lea.vmem [#allocation5], %s1055
          %1057 = dma.done %s1053, 512
        $region60: #{tpu_custom_call.1} parent=55 // pred_fallthru
          _
      $region56: #{tpu_custom_call.1} parent=5 // pred_fallthru
        _
    $region6: #{tpu_custom_call.1} parent=1 // loop_footer
      %s20 = sadd.s32 1, %s16
    $region7: #{tpu_custom_call.1} parent=1 // loop_footer_branch
      %15 = sbr.rel target = $region3
    $region8: #{tpu_custom_call.1} parent=1 // loop_exit
      _
    %1058 = vsyncpa [#allocation3], 1
    %s1059 = scalar_lea.sflag [#allocation3], 1
    %1060 = vsyncpa %s1059, 1
    %1061 = vsyncpa [#allocation4], 1
    %s1062 = scalar_lea.sflag [#allocation4], 1
    %1063 = vsyncpa %s1062, 1

</llo_original>
